<compile_context>
chip_gen: v7x
topology: tpu7x:2x2x1
jax: 0.10.0
libtpu: 0.0.40
codegen_flags: <defaults>
</compile_context>

<pallas_src>
import functools

import jax
import jax.numpy as jnp
from jax.experimental import pallas as pl
from jax.experimental.pallas import tpu as pltpu


LANE = 128          # pad hidden/output feature dims to a multiple of this
IN_ALIGN = 16       # input feature dim only needs bf16-sublane (16) alignment
B_ALIGN = 8         # batch tile alignment for an f32 x block


def _round_up(n, m):
    return ((n + m - 1) // m) * m


def _make_fused_kernel(num_layers, final_relu):
    """Kernel computing the whole MLP on one batch tile.

    refs = (x_ref, w0_ref, b0_ref, ..., w{L-1}_ref, b{L-1}_ref, o_ref)
      x_ref : (TB, D0)           f32  (cast to bf16 in-kernel)
      wl_ref: (Dl_pad, Dl+1_pad) bf16 (full weight, VMEM-resident)
      bl_ref: (1, Dl+1_pad)      f32
      o_ref : (TB, Dlast_pad)    f32
    """
    def kernel(*refs):
        x_ref = refs[0]
        o_ref = refs[1 + 2 * num_layers]
        h = x_ref[...].astype(jnp.bfloat16)          # f32->bf16 cast hidden under MXU
        for l in range(num_layers):
            w_ref = refs[1 + 2 * l]
            b_ref = refs[2 + 2 * l]
            y = jnp.dot(h, w_ref[...], preferred_element_type=jnp.float32)
            y = y + b_ref[...]                       # f32 bias epilogue (VPU filler)
            if final_relu or (l + 1 < num_layers):
                y = jnp.maximum(y, 0.0)
            h = y.astype(jnp.bfloat16) if l + 1 < num_layers else y
        o_ref[...] = h.astype(o_ref.dtype)
    return kernel


def _fused_pallas_call(x_pad, params, tile_b, final_relu):
    """x_pad: (B_pad, D0_pad) f32; params: tuple of (w bf16 padded, b f32 (1, Dout_pad))."""
    B, D0 = x_pad.shape
    num_layers = len(params)
    d_last = params[-1][0].shape[1]
    nb = B // tile_b
    grid = (nb,)

    in_specs = [pl.BlockSpec((tile_b, D0), lambda i: (i, 0))]     # x batch tile (f32)
    flat_args = [x_pad]
    for w, b in params:
        din, dout = w.shape
        # Full weight + bias resident in VMEM (constant index map); ~1.5 MB bf16
        # total for the default dims -> trivially fits every chip's VMEM even
        # with default double-buffering.
        in_specs.append(pl.BlockSpec((din, dout), lambda i: (0, 0)))
        in_specs.append(pl.BlockSpec((1, dout), lambda i: (0, 0)))
        flat_args += [w, b]

    # Only mark the batch axis parallel when there is actually >1 tile; at
    # grid=(1,) (the batch-64 case) there is nothing to shard across cores.
    semantics = ("parallel",) if nb > 1 else ("arbitrary",)

    return pl.pallas_call(
        _make_fused_kernel(num_layers, final_relu),
        out_shape=jax.ShapeDtypeStruct((B, d_last), jnp.float32),
        grid_spec=pltpu.PrefetchScalarGridSpec(
            num_scalar_prefetch=0,
            grid=grid,
            in_specs=in_specs,
            out_specs=pl.BlockSpec((tile_b, d_last), lambda i: (i, 0)),
        ),
        compiler_params=pltpu.CompilerParams(dimension_semantics=semantics),
    )(*flat_args)


def _pick_tile_b(batch):
    """Biggest useful batch tile: one tile for small batches, 512/256/128 at scale."""
    b_aligned = _round_up(batch, B_ALIGN)
    if b_aligned <= 512:
        return b_aligned                      # grid=(1,): whole batch, full MXU M
    for cand in (512, 256, 128):
        if b_aligned % cand == 0:
            return cand
    return 256                                # pad batch up to a multiple of 256


@functools.partial(jax.jit, static_argnames=("out_dim", "tile_b", "final_relu"))
def bpnet_forward(x, params, out_dim, tile_b=None, final_relu=True):
    """Forward pass of BPNet as one fused Pallas kernel.

    x: (B, D_in) f32 (unpadded). params: padded bf16/f32 params from init.
    Returns (B, out_dim) f32 logits.
    """
    B, d_in = x.shape
    d0_pad = params[0][0].shape[0]

    if tile_b is None:
        tile_b = _pick_tile_b(B)
    b_pad = _round_up(B, tile_b)

    # Pad only if actually needed (batch 64 / 784 features needs NO wrapper copy).
    if b_pad != B or d0_pad != d_in:
        x = jnp.pad(x, ((0, b_pad - B), (0, d0_pad - d_in)))

    y_pad = _fused_pallas_call(x, params, tile_b, final_relu)
    return y_pad[:B, :out_dim]


def init_bpnet_params(key, dims):
    """Deterministic params mimicking PyTorch nn.Linear default init:
    uniform(-1/sqrt(fan_in), 1/sqrt(fan_in)) for weight and bias.

    Returns:
      padded : tuple of (w bf16 (Din_pad, Dout_pad), b f32 (1, Dout_pad)) for the kernel
               (stored as (D_in, D_out) == transpose of PyTorch's (out, in)).
               Only hidden/output dims are 128-padded; the input dim keeps its
               natural size (16-aligned) -> no wasted K work on layer 0.
      ref    : tuple of (w f32 (Din, Dout), b f32 (Dout,)) for the pure-JAX reference
    """
    n = len(dims) - 1
    # Padded dims: input only sublane-aligned, hidden/output lane(128)-padded.
    pdims = [_round_up(dims[0], IN_ALIGN)] + [_round_up(d, LANE) for d in dims[1:]]

    padded, ref = [], []
    for d in range(n):
        fan_in, fan_out = dims[d], dims[d + 1]
        key, kw, kb = jax.random.split(key, 3)
        bound = float(fan_in) ** -0.5
        w = jax.random.uniform(kw, (fan_in, fan_out), jnp.float32, -bound, bound)
        b = jax.random.uniform(kb, (fan_out,), jnp.float32, -bound, bound)
        ref.append((w, b))

        fi_p, fo_p = pdims[d], pdims[d + 1]
        w_pad = jnp.zeros((fi_p, fo_p), jnp.bfloat16)
        w_pad = w_pad.at[:fan_in, :fan_out].set(w.astype(jnp.bfloat16))
        b_pad = jnp.zeros((1, fo_p), jnp.float32).at[0, :fan_out].set(b)
        padded.append((w_pad, b_pad))
    return tuple(padded), tuple(ref)


def bpnet_forward_ref(x, ref_params, final_relu=True):
    """Pure-JAX reference with matching numerics (bf16 MXU inputs, f32 accumulate)."""
    h = x
    n = len(ref_params)
    for l, (w, b) in enumerate(ref_params):
        y = jnp.dot(h.astype(jnp.bfloat16), w.astype(jnp.bfloat16),
                    preferred_element_type=jnp.float32) + b
        h = jnp.maximum(y, 0.0) if (final_relu or l + 1 < n) else y
    return h


if __name__ == "__main__":
    key = jax.random.PRNGKey(0)

    dims = [784, 500, 400, 10]     # BPNet default dims
    batch = 64                     # matches BPNet.batch_size

    kx, kp = jax.random.split(key)
    x = jax.random.normal(kx, (batch, dims[0]), jnp.float32)
    params, ref_params = init_bpnet_params(kp, dims)

    # Auto tile: batch 64 -> single (64, 784) tile, grid=(1,), weights DMA'd once.
    out = bpnet_forward(x, params, out_dim=dims[-1])
    out = jax.block_until_ready(out)

    ref = bpnet_forward_ref(x, ref_params)
    assert out.shape == (batch, dims[-1]), out.shape
    assert jnp.allclose(out, ref, atol=1e-3, rtol=1e-3), float(jnp.max(jnp.abs(out - ref)))

    print("KERNEL_OK")
</pallas_src>

<mosaic_0001>
module attributes {stable_mosaic.version = 11 : i64} {
  func.func @kernel(%arg0: i32, %arg1: memref<64x784xf32, #tpu.memory_space<vmem>>, %arg2: memref<784x512xbf16, #tpu.memory_space<vmem>>, %arg3: memref<1x512xf32, #tpu.memory_space<vmem>>, %arg4: memref<512x512xbf16, #tpu.memory_space<vmem>>, %arg5: memref<1x512xf32, #tpu.memory_space<vmem>>, %arg6: memref<512x128xbf16, #tpu.memory_space<vmem>>, %arg7: memref<1x128xf32, #tpu.memory_space<vmem>>, %arg8: memref<64x128xf32, #tpu.memory_space<vmem>>) attributes {dimension_semantics = [#tpu.dimension_semantics<arbitrary>], iteration_bounds = array<i64: 1>, scalar_prefetch = 0 : i64, scratch_operands = 0 : i64, tpu.core_type = #tpu.core_type<tc>, window_params = [{transform_indices = @transform_0, window_bounds = array<i64: 64, 784>}, {pipeline_mode = #tpu.pipeline_mode<synchronous>, transform_indices = @transform_1, window_bounds = array<i64: 784, 512>}, {pipeline_mode = #tpu.pipeline_mode<synchronous>, transform_indices = @transform_2, window_bounds = array<i64: 1, 512>}, {pipeline_mode = #tpu.pipeline_mode<synchronous>, transform_indices = @transform_3, window_bounds = array<i64: 512, 512>}, {pipeline_mode = #tpu.pipeline_mode<synchronous>, transform_indices = @transform_4, window_bounds = array<i64: 1, 512>}, {pipeline_mode = #tpu.pipeline_mode<synchronous>, transform_indices = @transform_5, window_bounds = array<i64: 512, 128>}, {pipeline_mode = #tpu.pipeline_mode<synchronous>, transform_indices = @transform_6, window_bounds = array<i64: 1, 128>}, {transform_indices = @transform_7, window_bounds = array<i64: 64, 128>}]} {
    %c0 = arith.constant 0 : index
    %c0_0 = arith.constant 0 : index
    %0 = vector.load %arg1[%c0, %c0_0] : memref<64x784xf32, #tpu.memory_space<vmem>>, vector<64x784xf32>
    %1 = arith.truncf %0 : vector<64x784xf32> to vector<64x784xbf16>
    %c0_1 = arith.constant 0 : index
    %c0_2 = arith.constant 0 : index
    %2 = vector.load %arg2[%c0_1, %c0_2] : memref<784x512xbf16, #tpu.memory_space<vmem>>, vector<784x512xbf16>
    %cst = arith.constant dense<0.000000e+00> : vector<64x512xf32>
    %3 = tpu.matmul %1, %2, %cst {dimension_numbers = #tpu.dot_dimension_numbers<[1], [0], [0], [1], [0, 0, 1, 1], [], []>} : vector<64x784xbf16>, vector<784x512xbf16>, vector<64x512xf32> -> vector<64x512xf32>
    %c0_3 = arith.constant 0 : index
    %c0_4 = arith.constant 0 : index
    %4 = vector.load %arg3[%c0_3, %c0_4] : memref<1x512xf32, #tpu.memory_space<vmem>>, vector<1x512xf32>
    %5 = vector.broadcast %4 : vector<1x512xf32> to vector<64x512xf32>
    %6 = arith.addf %3, %5 : vector<64x512xf32>
    %cst_5 = arith.constant 0.000000e+00 : f32
    %7 = vector.broadcast %cst_5 : f32 to vector<64x512xf32>
    %8 = arith.maximumf %6, %7 : vector<64x512xf32>
    %9 = arith.truncf %8 : vector<64x512xf32> to vector<64x512xbf16>
    %c0_6 = arith.constant 0 : index
    %c0_7 = arith.constant 0 : index
    %10 = vector.load %arg4[%c0_6, %c0_7] : memref<512x512xbf16, #tpu.memory_space<vmem>>, vector<512x512xbf16>
    %cst_8 = arith.constant dense<0.000000e+00> : vector<64x512xf32>
    %11 = tpu.matmul %9, %10, %cst_8 {dimension_numbers = #tpu.dot_dimension_numbers<[1], [0], [0], [1], [0, 0, 1, 1], [], []>} : vector<64x512xbf16>, vector<512x512xbf16>, vector<64x512xf32> -> vector<64x512xf32>
    %c0_9 = arith.constant 0 : index
    %c0_10 = arith.constant 0 : index
    %12 = vector.load %arg5[%c0_9, %c0_10] : memref<1x512xf32, #tpu.memory_space<vmem>>, vector<1x512xf32>
    %13 = vector.broadcast %12 : vector<1x512xf32> to vector<64x512xf32>
    %14 = arith.addf %11, %13 : vector<64x512xf32>
    %cst_11 = arith.constant 0.000000e+00 : f32
    %15 = vector.broadcast %cst_11 : f32 to vector<64x512xf32>
    %16 = arith.maximumf %14, %15 : vector<64x512xf32>
    %17 = arith.truncf %16 : vector<64x512xf32> to vector<64x512xbf16>
    %c0_12 = arith.constant 0 : index
    %c0_13 = arith.constant 0 : index
    %18 = vector.load %arg6[%c0_12, %c0_13] : memref<512x128xbf16, #tpu.memory_space<vmem>>, vector<512x128xbf16>
    %cst_14 = arith.constant dense<0.000000e+00> : vector<64x128xf32>
    %19 = tpu.matmul %17, %18, %cst_14 {dimension_numbers = #tpu.dot_dimension_numbers<[1], [0], [0], [1], [0, 0, 1, 1], [], []>} : vector<64x512xbf16>, vector<512x128xbf16>, vector<64x128xf32> -> vector<64x128xf32>
    %c0_15 = arith.constant 0 : index
    %c0_16 = arith.constant 0 : index
    %20 = vector.load %arg7[%c0_15, %c0_16] : memref<1x128xf32, #tpu.memory_space<vmem>>, vector<1x128xf32>
    %21 = vector.broadcast %20 : vector<1x128xf32> to vector<64x128xf32>
    %22 = arith.addf %19, %21 : vector<64x128xf32>
    %cst_17 = arith.constant 0.000000e+00 : f32
    %23 = vector.broadcast %cst_17 : f32 to vector<64x128xf32>
    %24 = arith.maximumf %22, %23 : vector<64x128xf32>
    %c0_18 = arith.constant 0 : index
    %c0_19 = arith.constant 0 : index
    %25 = vector.load %arg8[%c0_18, %c0_19] : memref<64x128xf32, #tpu.memory_space<vmem>>, vector<64x128xf32>
    tpu.vector_store %arg8[%c0_18, %c0_19], %24 {strides = array<i32>} : memref<64x128xf32, #tpu.memory_space<vmem>>, vector<64x128xf32>,
    return
  }
  func.func @transform_0(%arg0: i32) -> (i32, i32) {
    %c0_i32 = arith.constant 0 : i32
    %c0_i32_0 = arith.constant 0 : i32
    return %arg0, %c0_i32 : i32, i32
  }
  func.func @transform_1(%arg0: i32) -> (i32, i32) {
    %c0_i32 = arith.constant 0 : i32
    %c0_i32_0 = arith.constant 0 : i32
    %c0_i32_1 = arith.constant 0 : i32
    return %c0_i32, %c0_i32_0 : i32, i32
  }
  func.func @transform_2(%arg0: i32) -> (i32, i32) {
    %c0_i32 = arith.constant 0 : i32
    %c0_i32_0 = arith.constant 0 : i32
    %c0_i32_1 = arith.constant 0 : i32
    return %c0_i32, %c0_i32_0 : i32, i32
  }
  func.func @transform_3(%arg0: i32) -> (i32, i32) {
    %c0_i32 = arith.constant 0 : i32
    %c0_i32_0 = arith.constant 0 : i32
    %c0_i32_1 = arith.constant 0 : i32
    return %c0_i32, %c0_i32_0 : i32, i32
  }
  func.func @transform_4(%arg0: i32) -> (i32, i32) {
    %c0_i32 = arith.constant 0 : i32
    %c0_i32_0 = arith.constant 0 : i32
    %c0_i32_1 = arith.constant 0 : i32
    return %c0_i32, %c0_i32_0 : i32, i32
  }
  func.func @transform_5(%arg0: i32) -> (i32, i32) {
    %c0_i32 = arith.constant 0 : i32
    %c0_i32_0 = arith.constant 0 : i32
    %c0_i32_1 = arith.constant 0 : i32
    return %c0_i32, %c0_i32_0 : i32, i32
  }
  func.func @transform_6(%arg0: i32) -> (i32, i32) {
    %c0_i32 = arith.constant 0 : i32
    %c0_i32_0 = arith.constant 0 : i32
    %c0_i32_1 = arith.constant 0 : i32
    return %c0_i32, %c0_i32_0 : i32, i32
  }
  func.func @transform_7(%arg0: i32) -> (i32, i32) {
    %c0_i32 = arith.constant 0 : i32
    %c0_i32_0 = arith.constant 0 : i32
    return %arg0, %c0_i32 : i32, i32
  }
}

</mosaic_0001>

<llo_original>
// kernel: bpnet_forward.1
$region0: #{bpnet_forward.1}
  #allocation0 [shape = 'u32[]', space=smem, size = 0x4, offset = 0x4, fixed_abs, tag = 'smem constant byte address 0x4 - core index']
  #allocation1 [shape = 'u32[144,128]{1,0:T(1,128)}', space=vmem, size = 0x12000, scoped, tag = 'internal scratch']
  %s0 = inlined_call_operand.hbm [shape: f32[64,784], index: 0, kind: input, shape index: {}]
  %s1 = inlined_call_operand.hbm [shape: bf16[784,512], index: 1, kind: input, shape index: {}]
  %s2 = inlined_call_operand.vmem [shape: f32[1,512], index: 2, kind: input, shape index: {}]
  %s3 = inlined_call_operand.hbm [shape: bf16[512,512], index: 3, kind: input, shape index: {}]
  %s4 = inlined_call_operand.vmem [shape: f32[1,512], index: 4, kind: input, shape index: {}]
  %s5 = inlined_call_operand.hbm [shape: bf16[512,128], index: 5, kind: input, shape index: {}]
  %s6 = inlined_call_operand.vmem [shape: f32[1,128], index: 6, kind: input, shape index: {}]
  %s7 = inlined_call_operand.vmem [shape: f32[64,128], index: 7, kind: output, shape index: {}]
  %s8 = sld [smem:[#allocation0]]
  $region54: #{bpnet_forward.1} parent=0
    _
  %s10 = ssub.s32 1, %s8
  %s11 = scalar_select 0, %s10, %s8
  $region1: #{bpnet_forward.1} parent=0
    #allocation2 [shape = 'u8[229376]{0}', space=vmem, size = 0x38000, scoped, tag = 'input window, operand 0, single buffered']
    #allocation3 [shape = 's32[1]{0}', space=sflag, size = 0x4, scoped, tag = 'scoped memory for bpnet_forward.1']
    #allocation4 [shape = 'u8[802816]{0}', space=vmem, size = 0xc4000, scoped, tag = 'input window, operand 1, single buffered']
    #allocation5 [shape = 's32[1]{0}', space=sflag, size = 0x4, scoped, tag = 'scoped memory for bpnet_forward.1']
    #allocation6 [shape = 'u8[524288]{0}', space=vmem, size = 0x80000, scoped, tag = 'input window, operand 3, single buffered']
    #allocation7 [shape = 'u8[131072]{0}', space=vmem, size = 0x20000, scoped, tag = 'input window, operand 5, single buffered']
    #allocation8 [shape = 's32[1]{0}', space=sflag, size = 0x4, scoped, tag = 'scoped memory for bpnet_forward.1']
    %12 = vsyncpa [#allocation3], 0
    %13 = vsyncpa [#allocation5], 0
    %14 = vsyncpa [#allocation8], 0
    // Predicated region
    $region2: #{bpnet_forward.1} parent=1 // pred_check
      _
    $region3: #{bpnet_forward.1} parent=1 // pred_check_branch
      %16 = sbr.rel (0) target = $region5
    $region4: #{bpnet_forward.1} parent=1 // pred_region
      %s18 = ssub.s32 7168, 7168
      %19 = vsyncadd [#allocation3], %s18
      %s20 = sshll.u32 [#allocation2], 4
      %s21 = int_to_ptr.vmem [resolvable:$true] %s20
      %26 = dma.hbm_to_vmem [thread:$0]  %s0, 7168, %s21, [#allocation3], 896, 896, 56
    $region5: #{bpnet_forward.1} parent=1 // pred_fallthru
      _
    // Predicated region
    $region6: #{bpnet_forward.1} parent=1 // pred_check
      _
    $region7: #{bpnet_forward.1} parent=1 // pred_check_branch
      %28 = sbr.rel (0) target = $region9
    $region8: #{bpnet_forward.1} parent=1 // pred_region
      %s30 = ssub.s32 25088, 25088
      %31 = vsyncadd [#allocation5], %s30
      %s32 = sshll.u32 [#allocation4], 4
      %s33 = int_to_ptr.vmem [resolvable:$true] %s32
      %38 = dma.hbm_to_vmem [thread:$0]  %s1, 25088, %s33, [#allocation5], 256, 256, 16
    $region9: #{bpnet_forward.1} parent=1 // pred_fallthru
      _
    // Predicated region
    $region10: #{bpnet_forward.1} parent=1 // pred_check
      _
    $region11: #{bpnet_forward.1} parent=1 // pred_check_branch
      %40 = sbr.rel (0) target = $region13
    $region12: #{bpnet_forward.1} parent=1 // pred_region
      _
    $region13: #{bpnet_forward.1} parent=1 // pred_fallthru
      _
    // Predicated region
    $region14: #{bpnet_forward.1} parent=1 // pred_check
      _
    $region15: #{bpnet_forward.1} parent=1 // pred_check_branch
      %42 = sbr.rel (0) target = $region17
    $region16: #{bpnet_forward.1} parent=1 // pred_region
      %s44 = ssub.s32 16384, 16384
      %45 = vsyncadd [#allocation5], %s44
      %s46 = sshll.u32 [#allocation6], 4
      %s47 = int_to_ptr.vmem [resolvable:$true] %s46
      %52 = dma.hbm_to_vmem [thread:$0]  %s3, 16384, %s47, [#allocation5], 256, 256, 16
    $region17: #{bpnet_forward.1} parent=1 // pred_fallthru
      _
    // Predicated region
    $region18: #{bpnet_forward.1} parent=1 // pred_check
      _
    $region19: #{bpnet_forward.1} parent=1 // pred_check_branch
      %54 = sbr.rel (0) target = $region21
    $region20: #{bpnet_forward.1} parent=1 // pred_region
      _
    $region21: #{bpnet_forward.1} parent=1 // pred_fallthru
      _
    // Predicated region
    $region22: #{bpnet_forward.1} parent=1 // pred_check
      _
    $region23: #{bpnet_forward.1} parent=1 // pred_check_branch
      %56 = sbr.rel (0) target = $region25
    $region24: #{bpnet_forward.1} parent=1 // pred_region
      %s58 = ssub.s32 4096, 4096
      %59 = vsyncadd [#allocation8], %s58
      %s60 = sshll.u32 [#allocation7], 4
      %s61 = int_to_ptr.vmem [resolvable:$true] %s60
      %66 = dma.hbm_to_vmem [thread:$0]  %s5, 4096, %s61, [#allocation8], 64, 64, 4
    $region25: #{bpnet_forward.1} parent=1 // pred_fallthru
      _
    // Predicated region
    $region26: #{bpnet_forward.1} parent=1 // pred_check
      _
    $region27: #{bpnet_forward.1} parent=1 // pred_check_branch
      %68 = sbr.rel (0) target = $region29
    $region28: #{bpnet_forward.1} parent=1 // pred_region
      _
    $region29: #{bpnet_forward.1} parent=1 // pred_fallthru
      _
    // Predicated region
    $region30: #{bpnet_forward.1} parent=1 // pred_check
      _
    $region31: #{bpnet_forward.1} parent=1 // pred_check_branch
      %70 = sbr.rel (0) target = $region33
    $region32: #{bpnet_forward.1} parent=1 // pred_region
      %71 = dma.done [#allocation3], 7168
    $region33: #{bpnet_forward.1} parent=1 // pred_fallthru
      _
    // Predicated region
    $region34: #{bpnet_forward.1} parent=1 // pred_check
      _
    $region35: #{bpnet_forward.1} parent=1 // pred_check_branch
      %73 = sbr.rel (0) target = $region37
    $region36: #{bpnet_forward.1} parent=1 // pred_region
      %74 = dma.done [#allocation5], 25088
    $region37: #{bpnet_forward.1} parent=1 // pred_fallthru
      _
    // Predicated region
    $region38: #{bpnet_forward.1} parent=1 // pred_check
      _
    $region39: #{bpnet_forward.1} parent=1 // pred_check_branch
      %76 = sbr.rel (0) target = $region41
    $region40: #{bpnet_forward.1} parent=1 // pred_region
      %77 = dma.done [#allocation5], 16384
    $region41: #{bpnet_forward.1} parent=1 // pred_fallthru
      _
    // Predicated region
    $region42: #{bpnet_forward.1} parent=1 // pred_check
      _
    $region43: #{bpnet_forward.1} parent=1 // pred_check_branch
      %79 = sbr.rel (0) target = $region45
    $region44: #{bpnet_forward.1} parent=1 // pred_region
      %80 = dma.done [#allocation8], 4096
    $region45: #{bpnet_forward.1} parent=1 // pred_fallthru
      _
    %v82 = vld [vmem:[#allocation2] sm:$0xff]
    %v83 = vld [vmem:[#allocation2 + $0x8] sm:$0xff]
    %v84 = vld [vmem:[#allocation2 + $0x10] sm:$0xff]
    %v85 = vld [vmem:[#allocation2 + $0x18] sm:$0xff]
    %v86 = vld [vmem:[#allocation2 + $0x20] sm:$0xff]
    %v87 = vld [vmem:[#allocation2 + $0x28] sm:$0xff]
    %v88 = vld [vmem:[#allocation2 + $0x30] sm:$0xff]
    %v89 = vld [vmem:[#allocation2 + $0x38] sm:$0xff]
    %v90 = vld [vmem:[#allocation2 + $0x40] sm:$0xff]
    %v91 = vld [vmem:[#allocation2 + $0x48] sm:$0xff]
    %v92 = vld [vmem:[#allocation2 + $0x50] sm:$0xff]
    %v93 = vld [vmem:[#allocation2 + $0x58] sm:$0xff]
    %v94 = vld [vmem:[#allocation2 + $0x60] sm:$0xff]
    %v95 = vld [vmem:[#allocation2 + $0x68] sm:$0xff]
    %v96 = vld [vmem:[#allocation2 + $0x70] sm:$0xff]
    %v97 = vld [vmem:[#allocation2 + $0x78] sm:$0xff]
    %v98 = vld [vmem:[#allocation2 + $0x80] sm:$0xff]
    %v99 = vld [vmem:[#allocation2 + $0x88] sm:$0xff]
    %v100 = vld [vmem:[#allocation2 + $0x90] sm:$0xff]
    %v101 = vld [vmem:[#allocation2 + $0x98] sm:$0xff]
    %v102 = vld [vmem:[#allocation2 + $0xa0] sm:$0xff]
    %v103 = vld [vmem:[#allocation2 + $0xa8] sm:$0xff]
    %v104 = vld [vmem:[#allocation2 + $0xb0] sm:$0xff]
    %v105 = vld [vmem:[#allocation2 + $0xb8] sm:$0xff]
    %v106 = vld [vmem:[#allocation2 + $0xc0] sm:$0xff]
    %v107 = vld [vmem:[#allocation2 + $0xc8] sm:$0xff]
    %v108 = vld [vmem:[#allocation2 + $0xd0] sm:$0xff]
    %v109 = vld [vmem:[#allocation2 + $0xd8] sm:$0xff]
    %v110 = vld [vmem:[#allocation2 + $0xe0] sm:$0xff]
    %v111 = vld [vmem:[#allocation2 + $0xe8] sm:$0xff]
    %v112 = vld [vmem:[#allocation2 + $0xf0] sm:$0xff]
    %v113 = vld [vmem:[#allocation2 + $0xf8] sm:$0xff]
    %v114 = vld [vmem:[#allocation2 + $0x100] sm:$0xff]
    %v115 = vld [vmem:[#allocation2 + $0x108] sm:$0xff]
    %v116 = vld [vmem:[#allocation2 + $0x110] sm:$0xff]
    %v117 = vld [vmem:[#allocation2 + $0x118] sm:$0xff]
    %v118 = vld [vmem:[#allocation2 + $0x120] sm:$0xff]
    %v119 = vld [vmem:[#allocation2 + $0x128] sm:$0xff]
    %v120 = vld [vmem:[#allocation2 + $0x130] sm:$0xff]
    %v121 = vld [vmem:[#allocation2 + $0x138] sm:$0xff]
    %v122 = vld [vmem:[#allocation2 + $0x140] sm:$0xff]
    %v123 = vld [vmem:[#allocation2 + $0x148] sm:$0xff]
    %v124 = vld [vmem:[#allocation2 + $0x150] sm:$0xff]
    %v125 = vld [vmem:[#allocation2 + $0x158] sm:$0xff]
    %v126 = vld [vmem:[#allocation2 + $0x160] sm:$0xff]
    %v127 = vld [vmem:[#allocation2 + $0x168] sm:$0xff]
    %v128 = vld [vmem:[#allocation2 + $0x170] sm:$0xff]
    %v129 = vld [vmem:[#allocation2 + $0x178] sm:$0xff]
    %v130 = vld [vmem:[#allocation2 + $0x180] sm:$0xff]
    %v131 = vld [vmem:[#allocation2 + $0x188] sm:$0xff]
    %v132 = vld [vmem:[#allocation2 + $0x190] sm:$0xff]
    %v133 = vld [vmem:[#allocation2 + $0x198] sm:$0xff]
    %v134 = vld [vmem:[#allocation2 + $0x1a0] sm:$0xff]
    %v135 = vld [vmem:[#allocation2 + $0x1a8] sm:$0xff]
    %v136 = vld [vmem:[#allocation2 + $0x1b0] sm:$0xff]
    %v137 = vld [vmem:[#allocation2 + $0x1b8] sm:$0xff]
    %v138 = vpack.c.bf16 %v89, %v82
    %v139 = vpack.c.bf16 %v90, %v83
    %v140 = vpack.c.bf16 %v91, %v84
    %v141 = vpack.c.bf16 %v92, %v85
    %v142 = vpack.c.bf16 %v93, %v86
    %v143 = vpack.c.bf16 %v94, %v87
    %v144 = vpack.c.bf16 %v95, %v88
    %v145 = vpack.c.bf16 %v103, %v96
    %v146 = vpack.c.bf16 %v104, %v97
    %v147 = vpack.c.bf16 %v105, %v98
    %v148 = vpack.c.bf16 %v106, %v99
    %v149 = vpack.c.bf16 %v107, %v100
    %v150 = vpack.c.bf16 %v108, %v101
    %v151 = vpack.c.bf16 %v109, %v102
    %v152 = vpack.c.bf16 %v117, %v110
    %v153 = vpack.c.bf16 %v118, %v111
    %v154 = vpack.c.bf16 %v119, %v112
    %v155 = vpack.c.bf16 %v120, %v113
    %v156 = vpack.c.bf16 %v121, %v114
    %v157 = vpack.c.bf16 %v122, %v115
    %v158 = vpack.c.bf16 %v123, %v116
    %v159 = vpack.c.bf16 %v131, %v124
    %v160 = vpack.c.bf16 %v132, %v125
    %v161 = vpack.c.bf16 %v133, %v126
    %v162 = vpack.c.bf16 %v134, %v127
    %v163 = vpack.c.bf16 %v135, %v128
    %v164 = vpack.c.bf16 %v136, %v129
    %v165 = vpack.c.bf16 %v137, %v130
    %v166 = vld [vmem:[#allocation4] sm:$0xff]
    %v167 = vld [vmem:[#allocation4 + $0x8] sm:$0xff]
    %v168 = vld [vmem:[#allocation4 + $0x10] sm:$0xff]
    %v169 = vld [vmem:[#allocation4 + $0x18] sm:$0xff]
    %v170 = vld [vmem:[#allocation4 + $0x20] sm:$0xff]
    %v171 = vld [vmem:[#allocation4 + $0x28] sm:$0xff]
    %v172 = vld [vmem:[#allocation4 + $0x30] sm:$0xff]
    %v173 = vld [vmem:[#allocation4 + $0x38] sm:$0xff]
    %v174 = vld [vmem:[#allocation4 + $0x40] sm:$0xff]
    %v175 = vld [vmem:[#allocation4 + $0x48] sm:$0xff]
    %v176 = vld [vmem:[#allocation4 + $0x50] sm:$0xff]
    %v177 = vld [vmem:[#allocation4 + $0x58] sm:$0xff]
    %v178 = vld [vmem:[#allocation4 + $0x60] sm:$0xff]
    %v179 = vld [vmem:[#allocation4 + $0x68] sm:$0xff]
    %v180 = vld [vmem:[#allocation4 + $0x70] sm:$0xff]
    %v181 = vld [vmem:[#allocation4 + $0x78] sm:$0xff]
    %v182 = vld [vmem:[#allocation4 + $0x80] sm:$0xff]
    %v183 = vld [vmem:[#allocation4 + $0x88] sm:$0xff]
    %v184 = vld [vmem:[#allocation4 + $0x90] sm:$0xff]
    %v185 = vld [vmem:[#allocation4 + $0x98] sm:$0xff]
    %v186 = vld [vmem:[#allocation4 + $0xa0] sm:$0xff]
    %v187 = vld [vmem:[#allocation4 + $0xa8] sm:$0xff]
    %v188 = vld [vmem:[#allocation4 + $0xb0] sm:$0xff]
    %v189 = vld [vmem:[#allocation4 + $0xb8] sm:$0xff]
    %v190 = vld [vmem:[#allocation4 + $0xc0] sm:$0xff]
    %v191 = vld [vmem:[#allocation4 + $0xc8] sm:$0xff]
    %v192 = vld [vmem:[#allocation4 + $0xd0] sm:$0xff]
    %v193 = vld [vmem:[#allocation4 + $0xd8] sm:$0xff]
    %v194 = vld [vmem:[#allocation4 + $0xe0] sm:$0xff]
    %v195 = vld [vmem:[#allocation4 + $0xe8] sm:$0xff]
    %v196 = vld [vmem:[#allocation4 + $0xf0] sm:$0xff]
    %v197 = vld [vmem:[#allocation4 + $0xf8] sm:$0xff]
    %v198 = vld [vmem:[#allocation4 + $0x100] sm:$0xff]
    %v199 = vld [vmem:[#allocation4 + $0x108] sm:$0xff]
    %v200 = vld [vmem:[#allocation4 + $0x110] sm:$0xff]
    %v201 = vld [vmem:[#allocation4 + $0x118] sm:$0xff]
    %v202 = vld [vmem:[#allocation4 + $0x120] sm:$0xff]
    %v203 = vld [vmem:[#allocation4 + $0x128] sm:$0xff]
    %v204 = vld [vmem:[#allocation4 + $0x130] sm:$0xff]
    %v205 = vld [vmem:[#allocation4 + $0x138] sm:$0xff]
    %v206 = vld [vmem:[#allocation4 + $0x140] sm:$0xff]
    %v207 = vld [vmem:[#allocation4 + $0x148] sm:$0xff]
    %v208 = vld [vmem:[#allocation4 + $0x150] sm:$0xff]
    %v209 = vld [vmem:[#allocation4 + $0x158] sm:$0xff]
    %v210 = vld [vmem:[#allocation4 + $0x160] sm:$0xff]
    %v211 = vld [vmem:[#allocation4 + $0x168] sm:$0xff]
    %v212 = vld [vmem:[#allocation4 + $0x170] sm:$0xff]
    %v213 = vld [vmem:[#allocation4 + $0x178] sm:$0xff]
    %v214 = vld [vmem:[#allocation4 + $0x180] sm:$0xff]
    %v215 = vld [vmem:[#allocation4 + $0x188] sm:$0xff]
    %v216 = vld [vmem:[#allocation4 + $0x190] sm:$0xff]
    %v217 = vld [vmem:[#allocation4 + $0x198] sm:$0xff]
    %v218 = vld [vmem:[#allocation4 + $0x1a0] sm:$0xff]
    %v219 = vld [vmem:[#allocation4 + $0x1a8] sm:$0xff]
    %v220 = vld [vmem:[#allocation4 + $0x1b0] sm:$0xff]
    %v221 = vld [vmem:[#allocation4 + $0x1b8] sm:$0xff]
    %v222 = vld [vmem:[#allocation4 + $0x1c0] sm:$0xff]
    %v223 = vld [vmem:[#allocation4 + $0x1c8] sm:$0xff]
    %v224 = vld [vmem:[#allocation4 + $0x1d0] sm:$0xff]
    %v225 = vld [vmem:[#allocation4 + $0x1d8] sm:$0xff]
    %v226 = vld [vmem:[#allocation4 + $0x1e0] sm:$0xff]
    %v227 = vld [vmem:[#allocation4 + $0x1e8] sm:$0xff]
    %v228 = vld [vmem:[#allocation4 + $0x1f0] sm:$0xff]
    %v229 = vld [vmem:[#allocation4 + $0x1f8] sm:$0xff]
    %v230 = vld [vmem:[#allocation4 + $0x200] sm:$0xff]
    %v231 = vld [vmem:[#allocation4 + $0x208] sm:$0xff]
    %v232 = vld [vmem:[#allocation4 + $0x210] sm:$0xff]
    %v233 = vld [vmem:[#allocation4 + $0x218] sm:$0xff]
    %v234 = vld [vmem:[#allocation4 + $0x220] sm:$0xff]
    %v235 = vld [vmem:[#allocation4 + $0x228] sm:$0xff]
    %v236 = vld [vmem:[#allocation4 + $0x230] sm:$0xff]
    %v237 = vld [vmem:[#allocation4 + $0x238] sm:$0xff]
    %v238 = vld [vmem:[#allocation4 + $0x240] sm:$0xff]
    %v239 = vld [vmem:[#allocation4 + $0x248] sm:$0xff]
    %v240 = vld [vmem:[#allocation4 + $0x250] sm:$0xff]
    %v241 = vld [vmem:[#allocation4 + $0x258] sm:$0xff]
    %v242 = vld [vmem:[#allocation4 + $0x260] sm:$0xff]
    %v243 = vld [vmem:[#allocation4 + $0x268] sm:$0xff]
    %v244 = vld [vmem:[#allocation4 + $0x270] sm:$0xff]
    %v245 = vld [vmem:[#allocation4 + $0x278] sm:$0xff]
    %v246 = vld [vmem:[#allocation4 + $0x280] sm:$0xff]
    %v247 = vld [vmem:[#allocation4 + $0x288] sm:$0xff]
    %v248 = vld [vmem:[#allocation4 + $0x290] sm:$0xff]
    %v249 = vld [vmem:[#allocation4 + $0x298] sm:$0xff]
    %v250 = vld [vmem:[#allocation4 + $0x2a0] sm:$0xff]
    %v251 = vld [vmem:[#allocation4 + $0x2a8] sm:$0xff]
    %v252 = vld [vmem:[#allocation4 + $0x2b0] sm:$0xff]
    %v253 = vld [vmem:[#allocation4 + $0x2b8] sm:$0xff]
    %v254 = vld [vmem:[#allocation4 + $0x2c0] sm:$0xff]
    %v255 = vld [vmem:[#allocation4 + $0x2c8] sm:$0xff]
    %v256 = vld [vmem:[#allocation4 + $0x2d0] sm:$0xff]
    %v257 = vld [vmem:[#allocation4 + $0x2d8] sm:$0xff]
    %v258 = vld [vmem:[#allocation4 + $0x2e0] sm:$0xff]
    %v259 = vld [vmem:[#allocation4 + $0x2e8] sm:$0xff]
    %v260 = vld [vmem:[#allocation4 + $0x2f0] sm:$0xff]
    %v261 = vld [vmem:[#allocation4 + $0x2f8] sm:$0xff]
    %v262 = vld [vmem:[#allocation4 + $0x300] sm:$0xff]
    %v263 = vld [vmem:[#allocation4 + $0x308] sm:$0xff]
    %v264 = vld [vmem:[#allocation4 + $0x310] sm:$0xff]
    %v265 = vld [vmem:[#allocation4 + $0x318] sm:$0xff]
    %v266 = vld [vmem:[#allocation4 + $0x320] sm:$0xff]
    %v267 = vld [vmem:[#allocation4 + $0x328] sm:$0xff]
    %v268 = vld [vmem:[#allocation4 + $0x330] sm:$0xff]
    %v269 = vld [vmem:[#allocation4 + $0x338] sm:$0xff]
    %v270 = vld [vmem:[#allocation4 + $0x340] sm:$0xff]
    %v271 = vld [vmem:[#allocation4 + $0x348] sm:$0xff]
    %v272 = vld [vmem:[#allocation4 + $0x350] sm:$0xff]
    %v273 = vld [vmem:[#allocation4 + $0x358] sm:$0xff]
    %v274 = vld [vmem:[#allocation4 + $0x360] sm:$0xff]
    %v275 = vld [vmem:[#allocation4 + $0x368] sm:$0xff]
    %v276 = vld [vmem:[#allocation4 + $0x370] sm:$0xff]
    %v277 = vld [vmem:[#allocation4 + $0x378] sm:$0xff]
    %v278 = vld [vmem:[#allocation4 + $0x380] sm:$0xff]
    %v279 = vld [vmem:[#allocation4 + $0x388] sm:$0xff]
    %v280 = vld [vmem:[#allocation4 + $0x390] sm:$0xff]
    %v281 = vld [vmem:[#allocation4 + $0x398] sm:$0xff]
    %v282 = vld [vmem:[#allocation4 + $0x3a0] sm:$0xff]
    %v283 = vld [vmem:[#allocation4 + $0x3a8] sm:$0xff]
    %v284 = vld [vmem:[#allocation4 + $0x3b0] sm:$0xff]
    %v285 = vld [vmem:[#allocation4 + $0x3b8] sm:$0xff]
    %v286 = vld [vmem:[#allocation4 + $0x3c0] sm:$0xff]
    %v287 = vld [vmem:[#allocation4 + $0x3c8] sm:$0xff]
    %v288 = vld [vmem:[#allocation4 + $0x3d0] sm:$0xff]
    %v289 = vld [vmem:[#allocation4 + $0x3d8] sm:$0xff]
    %v290 = vld [vmem:[#allocation4 + $0x3e0] sm:$0xff]
    %v291 = vld [vmem:[#allocation4 + $0x3e8] sm:$0xff]
    %v292 = vld [vmem:[#allocation4 + $0x3f0] sm:$0xff]
    %v293 = vld [vmem:[#allocation4 + $0x3f8] sm:$0xff]
    %v294 = vld [vmem:[#allocation4 + $0x400] sm:$0xff]
    %v295 = vld [vmem:[#allocation4 + $0x408] sm:$0xff]
    %v296 = vld [vmem:[#allocation4 + $0x410] sm:$0xff]
    %v297 = vld [vmem:[#allocation4 + $0x418] sm:$0xff]
    %v298 = vld [vmem:[#allocation4 + $0x420] sm:$0xff]
    %v299 = vld [vmem:[#allocation4 + $0x428] sm:$0xff]
    %v300 = vld [vmem:[#allocation4 + $0x430] sm:$0xff]
    %v301 = vld [vmem:[#allocation4 + $0x438] sm:$0xff]
    %v302 = vld [vmem:[#allocation4 + $0x440] sm:$0xff]
    %v303 = vld [vmem:[#allocation4 + $0x448] sm:$0xff]
    %v304 = vld [vmem:[#allocation4 + $0x450] sm:$0xff]
    %v305 = vld [vmem:[#allocation4 + $0x458] sm:$0xff]
    %v306 = vld [vmem:[#allocation4 + $0x460] sm:$0xff]
    %v307 = vld [vmem:[#allocation4 + $0x468] sm:$0xff]
    %v308 = vld [vmem:[#allocation4 + $0x470] sm:$0xff]
    %v309 = vld [vmem:[#allocation4 + $0x478] sm:$0xff]
    %v310 = vld [vmem:[#allocation4 + $0x480] sm:$0xff]
    %v311 = vld [vmem:[#allocation4 + $0x488] sm:$0xff]
    %v312 = vld [vmem:[#allocation4 + $0x490] sm:$0xff]
    %v313 = vld [vmem:[#allocation4 + $0x498] sm:$0xff]
    %v314 = vld [vmem:[#allocation4 + $0x4a0] sm:$0xff]
    %v315 = vld [vmem:[#allocation4 + $0x4a8] sm:$0xff]
    %v316 = vld [vmem:[#allocation4 + $0x4b0] sm:$0xff]
    %v317 = vld [vmem:[#allocation4 + $0x4b8] sm:$0xff]
    %v318 = vld [vmem:[#allocation4 + $0x4c0] sm:$0xff]
    %v319 = vld [vmem:[#allocation4 + $0x4c8] sm:$0xff]
    %v320 = vld [vmem:[#allocation4 + $0x4d0] sm:$0xff]
    %v321 = vld [vmem:[#allocation4 + $0x4d8] sm:$0xff]
    %v322 = vld [vmem:[#allocation4 + $0x4e0] sm:$0xff]
    %v323 = vld [vmem:[#allocation4 + $0x4e8] sm:$0xff]
    %v324 = vld [vmem:[#allocation4 + $0x4f0] sm:$0xff]
    %v325 = vld [vmem:[#allocation4 + $0x4f8] sm:$0xff]
    %v326 = vld [vmem:[#allocation4 + $0x500] sm:$0xff]
    %v327 = vld [vmem:[#allocation4 + $0x508] sm:$0xff]
    %v328 = vld [vmem:[#allocation4 + $0x510] sm:$0xff]
    %v329 = vld [vmem:[#allocation4 + $0x518] sm:$0xff]
    %v330 = vld [vmem:[#allocation4 + $0x520] sm:$0xff]
    %v331 = vld [vmem:[#allocation4 + $0x528] sm:$0xff]
    %v332 = vld [vmem:[#allocation4 + $0x530] sm:$0xff]
    %v333 = vld [vmem:[#allocation4 + $0x538] sm:$0xff]
    %v334 = vld [vmem:[#allocation4 + $0x540] sm:$0xff]
    %v335 = vld [vmem:[#allocation4 + $0x548] sm:$0xff]
    %v336 = vld [vmem:[#allocation4 + $0x550] sm:$0xff]
    %v337 = vld [vmem:[#allocation4 + $0x558] sm:$0xff]
    %v338 = vld [vmem:[#allocation4 + $0x560] sm:$0xff]
    %v339 = vld [vmem:[#allocation4 + $0x568] sm:$0xff]
    %v340 = vld [vmem:[#allocation4 + $0x570] sm:$0xff]
    %v341 = vld [vmem:[#allocation4 + $0x578] sm:$0xff]
    %v342 = vld [vmem:[#allocation4 + $0x580] sm:$0xff]
    %v343 = vld [vmem:[#allocation4 + $0x588] sm:$0xff]
    %v344 = vld [vmem:[#allocation4 + $0x590] sm:$0xff]
    %v345 = vld [vmem:[#allocation4 + $0x598] sm:$0xff]
    %v346 = vld [vmem:[#allocation4 + $0x5a0] sm:$0xff]
    %v347 = vld [vmem:[#allocation4 + $0x5a8] sm:$0xff]
    %v348 = vld [vmem:[#allocation4 + $0x5b0] sm:$0xff]
    %v349 = vld [vmem:[#allocation4 + $0x5b8] sm:$0xff]
    %v350 = vld [vmem:[#allocation4 + $0x5c0] sm:$0xff]
    %v351 = vld [vmem:[#allocation4 + $0x5c8] sm:$0xff]
    %v352 = vld [vmem:[#allocation4 + $0x5d0] sm:$0xff]
    %v353 = vld [vmem:[#allocation4 + $0x5d8] sm:$0xff]
    %v354 = vld [vmem:[#allocation4 + $0x5e0] sm:$0xff]
    %v355 = vld [vmem:[#allocation4 + $0x5e8] sm:$0xff]
    %v356 = vld [vmem:[#allocation4 + $0x5f0] sm:$0xff]
    %v357 = vld [vmem:[#allocation4 + $0x5f8] sm:$0xff]
    %v358 = vld [vmem:[#allocation4 + $0x600] sm:$0xff]
    %v359 = vld [vmem:[#allocation4 + $0x608] sm:$0xff]
    %v360 = vld [vmem:[#allocation4 + $0x610] sm:$0xff]
    %v361 = vld [vmem:[#allocation4 + $0x618] sm:$0xff]
    %v362 = vld [vmem:[%s2] sm:$0xf]
    %v364 = vlaneseq
    %v365 = vshrl.u32 %v364, 7
    %v366 = vsub.s32 0, %v365
    %v367 = vrot.slane %v362, %v366
    %v368 = vlaneseq
    %v369 = vshrl.u32 %v368, 7
    %v370 = vsub.s32 1, %v369
    %v371 = vrot.slane %v362, %v370
    %v372 = vlaneseq
    %v373 = vshrl.u32 %v372, 7
    %v374 = vsub.s32 2, %v373
    %v375 = vrot.slane %v362, %v374
    %v376 = vlaneseq
    %v377 = vshrl.u32 %v376, 7
    %v378 = vsub.s32 3, %v377
    %v379 = vrot.slane %v362, %v378
    %v580 = vunpack.c.l.b16 %v166
    %v581 = vunpack.c.h.b16 %v166
    %v582 = vunpack.c.l.b16 %v167
    %v583 = vunpack.c.h.b16 %v167
    %v584 = vunpack.c.l.b16 %v168
    %v585 = vunpack.c.h.b16 %v168
    %v586 = vunpack.c.l.b16 %v169
    %v587 = vunpack.c.h.b16 %v169
    %v588 = vunpack.c.l.b16 %v170
    %v589 = vunpack.c.h.b16 %v170
    %v590 = vunpack.c.l.b16 %v171
    %v591 = vunpack.c.h.b16 %v171
    %v592 = vunpack.c.l.b16 %v172
    %v593 = vunpack.c.h.b16 %v172
    %v594 = vunpack.c.l.b16 %v173
    %v595 = vunpack.c.h.b16 %v173
    %v596 = vunpack.c.l.b16 %v174
    %v597 = vunpack.c.h.b16 %v174
    %v598 = vunpack.c.l.b16 %v175
    %v599 = vunpack.c.h.b16 %v175
    %v600 = vunpack.c.l.b16 %v176
    %v601 = vunpack.c.h.b16 %v176
    %v602 = vunpack.c.l.b16 %v177
    %v603 = vunpack.c.h.b16 %v177
    %v604 = vunpack.c.l.b16 %v178
    %v605 = vunpack.c.h.b16 %v178
    %v606 = vunpack.c.l.b16 %v179
    %v607 = vunpack.c.h.b16 %v179
    %v608 = vunpack.c.l.b16 %v180
    %v609 = vunpack.c.h.b16 %v180
    %v610 = vunpack.c.l.b16 %v181
    %v611 = vunpack.c.h.b16 %v181
    %v612 = vunpack.c.l.b16 %v182
    %v613 = vunpack.c.h.b16 %v182
    %v614 = vunpack.c.l.b16 %v183
    %v615 = vunpack.c.h.b16 %v183
    %v616 = vunpack.c.l.b16 %v184
    %v617 = vunpack.c.h.b16 %v184
    %v618 = vunpack.c.l.b16 %v185
    %v619 = vunpack.c.h.b16 %v185
    %v620 = vunpack.c.l.b16 %v186
    %v621 = vunpack.c.h.b16 %v186
    %v622 = vunpack.c.l.b16 %v187
    %v623 = vunpack.c.h.b16 %v187
    %v624 = vunpack.c.l.b16 %v188
    %v625 = vunpack.c.h.b16 %v188
    %v626 = vunpack.c.l.b16 %v189
    %v627 = vunpack.c.h.b16 %v189
    %v628 = vunpack.c.l.b16 %v190
    %v629 = vunpack.c.h.b16 %v190
    %v630 = vunpack.c.l.b16 %v191
    %v631 = vunpack.c.h.b16 %v191
    %v632 = vunpack.c.l.b16 %v192
    %v633 = vunpack.c.h.b16 %v192
    %v634 = vunpack.c.l.b16 %v193
    %v635 = vunpack.c.h.b16 %v193
    %v636 = vunpack.c.l.b16 %v194
    %v637 = vunpack.c.h.b16 %v194
    %v638 = vunpack.c.l.b16 %v195
    %v639 = vunpack.c.h.b16 %v195
    %v640 = vunpack.c.l.b16 %v196
    %v641 = vunpack.c.h.b16 %v196
    %v642 = vunpack.c.l.b16 %v197
    %v643 = vunpack.c.h.b16 %v197
    %v644 = vunpack.c.l.b16 %v198
    %v645 = vunpack.c.h.b16 %v198
    %v646 = vunpack.c.l.b16 %v199
    %v647 = vunpack.c.h.b16 %v199
    %v648 = vunpack.c.l.b16 %v200
    %v649 = vunpack.c.h.b16 %v200
    %v650 = vunpack.c.l.b16 %v201
    %v651 = vunpack.c.h.b16 %v201
    %v652 = vunpack.c.l.b16 %v202
    %v653 = vunpack.c.h.b16 %v202
    %v654 = vunpack.c.l.b16 %v203
    %v655 = vunpack.c.h.b16 %v203
    %v656 = vunpack.c.l.b16 %v204
    %v657 = vunpack.c.h.b16 %v204
    %v658 = vunpack.c.l.b16 %v205
    %v659 = vunpack.c.h.b16 %v205
    %v660 = vunpack.c.l.b16 %v206
    %v661 = vunpack.c.h.b16 %v206
    %v662 = vunpack.c.l.b16 %v207
    %v663 = vunpack.c.h.b16 %v207
    %v664 = vunpack.c.l.b16 %v208
    %v665 = vunpack.c.h.b16 %v208
    %v666 = vunpack.c.l.b16 %v209
    %v667 = vunpack.c.h.b16 %v209
    %v668 = vunpack.c.l.b16 %v210
    %v669 = vunpack.c.h.b16 %v210
    %v670 = vunpack.c.l.b16 %v211
    %v671 = vunpack.c.h.b16 %v211
    %v672 = vunpack.c.l.b16 %v212
    %v673 = vunpack.c.h.b16 %v212
    %v674 = vunpack.c.l.b16 %v213
    %v675 = vunpack.c.h.b16 %v213
    %v676 = vunpack.c.l.b16 %v214
    %v677 = vunpack.c.h.b16 %v214
    %v678 = vunpack.c.l.b16 %v215
    %v679 = vunpack.c.h.b16 %v215
    %v680 = vunpack.c.l.b16 %v216
    %v681 = vunpack.c.h.b16 %v216
    %v682 = vunpack.c.l.b16 %v217
    %v683 = vunpack.c.h.b16 %v217
    %v684 = vunpack.c.l.b16 %v218
    %v685 = vunpack.c.h.b16 %v218
    %v686 = vunpack.c.l.b16 %v219
    %v687 = vunpack.c.h.b16 %v219
    %v688 = vunpack.c.l.b16 %v220
    %v689 = vunpack.c.h.b16 %v220
    %v690 = vunpack.c.l.b16 %v221
    %v691 = vunpack.c.h.b16 %v221
    %v692 = vunpack.c.l.b16 %v222
    %v693 = vunpack.c.h.b16 %v222
    %v694 = vunpack.c.l.b16 %v223
    %v695 = vunpack.c.h.b16 %v223
    %v696 = vunpack.c.l.b16 %v224
    %v697 = vunpack.c.h.b16 %v224
    %v698 = vunpack.c.l.b16 %v225
    %v699 = vunpack.c.h.b16 %v225
    %v700 = vunpack.c.l.b16 %v226
    %v701 = vunpack.c.h.b16 %v226
    %v702 = vunpack.c.l.b16 %v227
    %v703 = vunpack.c.h.b16 %v227
    %v704 = vunpack.c.l.b16 %v228
    %v705 = vunpack.c.h.b16 %v228
    %v706 = vunpack.c.l.b16 %v229
    %v707 = vunpack.c.h.b16 %v229
    %v708 = vunpack.c.l.b16 %v230
    %v709 = vunpack.c.h.b16 %v230
    %v710 = vunpack.c.l.b16 %v231
    %v711 = vunpack.c.h.b16 %v231
    %v712 = vunpack.c.l.b16 %v232
    %v713 = vunpack.c.h.b16 %v232
    %v714 = vunpack.c.l.b16 %v233
    %v715 = vunpack.c.h.b16 %v233
    %v716 = vunpack.c.l.b16 %v234
    %v717 = vunpack.c.h.b16 %v234
    %v718 = vunpack.c.l.b16 %v235
    %v719 = vunpack.c.h.b16 %v235
    %v720 = vunpack.c.l.b16 %v236
    %v721 = vunpack.c.h.b16 %v236
    %v722 = vunpack.c.l.b16 %v237
    %v723 = vunpack.c.h.b16 %v237
    %v724 = vunpack.c.l.b16 %v238
    %v725 = vunpack.c.h.b16 %v238
    %v726 = vunpack.c.l.b16 %v239
    %v727 = vunpack.c.h.b16 %v239
    %v728 = vunpack.c.l.b16 %v240
    %v729 = vunpack.c.h.b16 %v240
    %v730 = vunpack.c.l.b16 %v241
    %v731 = vunpack.c.h.b16 %v241
    %v732 = vunpack.c.l.b16 %v242
    %v733 = vunpack.c.h.b16 %v242
    %v734 = vunpack.c.l.b16 %v243
    %v735 = vunpack.c.h.b16 %v243
    %v736 = vunpack.c.l.b16 %v244
    %v737 = vunpack.c.h.b16 %v244
    %v738 = vunpack.c.l.b16 %v245
    %v739 = vunpack.c.h.b16 %v245
    %v740 = vunpack.c.l.b16 %v246
    %v741 = vunpack.c.h.b16 %v246
    %v742 = vunpack.c.l.b16 %v247
    %v743 = vunpack.c.h.b16 %v247
    %v744 = vunpack.c.l.b16 %v248
    %v745 = vunpack.c.h.b16 %v248
    %v746 = vunpack.c.l.b16 %v249
    %v747 = vunpack.c.h.b16 %v249
    %v748 = vunpack.c.l.b16 %v250
    %v749 = vunpack.c.h.b16 %v250
    %v750 = vunpack.c.l.b16 %v251
    %v751 = vunpack.c.h.b16 %v251
    %v752 = vunpack.c.l.b16 %v252
    %v753 = vunpack.c.h.b16 %v252
    %v754 = vunpack.c.l.b16 %v253
    %v755 = vunpack.c.h.b16 %v253
    %v756 = vunpack.c.l.b16 %v254
    %v757 = vunpack.c.h.b16 %v254
    %v758 = vunpack.c.l.b16 %v255
    %v759 = vunpack.c.h.b16 %v255
    %v760 = vunpack.c.l.b16 %v256
    %v761 = vunpack.c.h.b16 %v256
    %v762 = vunpack.c.l.b16 %v257
    %v763 = vunpack.c.h.b16 %v257
    %v764 = vunpack.c.l.b16 %v258
    %v765 = vunpack.c.h.b16 %v258
    %v766 = vunpack.c.l.b16 %v259
    %v767 = vunpack.c.h.b16 %v259
    %v768 = vunpack.c.l.b16 %v260
    %v769 = vunpack.c.h.b16 %v260
    %v770 = vunpack.c.l.b16 %v261
    %v771 = vunpack.c.h.b16 %v261
    %v772 = vunpack.c.l.b16 %v262
    %v773 = vunpack.c.h.b16 %v262
    %v774 = vunpack.c.l.b16 %v263
    %v775 = vunpack.c.h.b16 %v263
    %v776 = vunpack.c.l.b16 %v264
    %v777 = vunpack.c.h.b16 %v264
    %v778 = vunpack.c.l.b16 %v265
    %v779 = vunpack.c.h.b16 %v265
    %v780 = vunpack.c.l.b16 %v266
    %v781 = vunpack.c.h.b16 %v266
    %v782 = vunpack.c.l.b16 %v267
    %v783 = vunpack.c.h.b16 %v267
    %v784 = vunpack.c.l.b16 %v268
    %v785 = vunpack.c.h.b16 %v268
    %v786 = vunpack.c.l.b16 %v269
    %v787 = vunpack.c.h.b16 %v269
    %v788 = vunpack.c.l.b16 %v270
    %v789 = vunpack.c.h.b16 %v270
    %v790 = vunpack.c.l.b16 %v271
    %v791 = vunpack.c.h.b16 %v271
    %v792 = vunpack.c.l.b16 %v272
    %v793 = vunpack.c.h.b16 %v272
    %v794 = vunpack.c.l.b16 %v273
    %v795 = vunpack.c.h.b16 %v273
    %v796 = vunpack.c.l.b16 %v274
    %v797 = vunpack.c.h.b16 %v274
    %v798 = vunpack.c.l.b16 %v275
    %v799 = vunpack.c.h.b16 %v275
    %v800 = vunpack.c.l.b16 %v276
    %v801 = vunpack.c.h.b16 %v276
    %v802 = vunpack.c.l.b16 %v277
    %v803 = vunpack.c.h.b16 %v277
    %v804 = vunpack.c.l.b16 %v278
    %v805 = vunpack.c.h.b16 %v278
    %v806 = vunpack.c.l.b16 %v279
    %v807 = vunpack.c.h.b16 %v279
    %v808 = vunpack.c.l.b16 %v280
    %v809 = vunpack.c.h.b16 %v280
    %v810 = vunpack.c.l.b16 %v281
    %v811 = vunpack.c.h.b16 %v281
    %v812 = vunpack.c.l.b16 %v282
    %v813 = vunpack.c.h.b16 %v282
    %v814 = vunpack.c.l.b16 %v283
    %v815 = vunpack.c.h.b16 %v283
    %v816 = vunpack.c.l.b16 %v284
    %v817 = vunpack.c.h.b16 %v284
    %v818 = vunpack.c.l.b16 %v285
    %v819 = vunpack.c.h.b16 %v285
    %v820 = vunpack.c.l.b16 %v286
    %v821 = vunpack.c.h.b16 %v286
    %v822 = vunpack.c.l.b16 %v287
    %v823 = vunpack.c.h.b16 %v287
    %v824 = vunpack.c.l.b16 %v288
    %v825 = vunpack.c.h.b16 %v288
    %v826 = vunpack.c.l.b16 %v289
    %v827 = vunpack.c.h.b16 %v289
    %v828 = vunpack.c.l.b16 %v290
    %v829 = vunpack.c.h.b16 %v290
    %v830 = vunpack.c.l.b16 %v291
    %v831 = vunpack.c.h.b16 %v291
    %v832 = vunpack.c.l.b16 %v292
    %v833 = vunpack.c.h.b16 %v292
    %v834 = vunpack.c.l.b16 %v293
    %v835 = vunpack.c.h.b16 %v293
    %v836 = vunpack.c.l.b16 %v294
    %v837 = vunpack.c.h.b16 %v294
    %v838 = vunpack.c.l.b16 %v295
    %v839 = vunpack.c.h.b16 %v295
    %v840 = vunpack.c.l.b16 %v296
    %v841 = vunpack.c.h.b16 %v296
    %v842 = vunpack.c.l.b16 %v297
    %v843 = vunpack.c.h.b16 %v297
    %v844 = vunpack.c.l.b16 %v298
    %v845 = vunpack.c.h.b16 %v298
    %v846 = vunpack.c.l.b16 %v299
    %v847 = vunpack.c.h.b16 %v299
    %v848 = vunpack.c.l.b16 %v300
    %v849 = vunpack.c.h.b16 %v300
    %v850 = vunpack.c.l.b16 %v301
    %v851 = vunpack.c.h.b16 %v301
    %v852 = vunpack.c.l.b16 %v302
    %v853 = vunpack.c.h.b16 %v302
    %v854 = vunpack.c.l.b16 %v303
    %v855 = vunpack.c.h.b16 %v303
    %v856 = vunpack.c.l.b16 %v304
    %v857 = vunpack.c.h.b16 %v304
    %v858 = vunpack.c.l.b16 %v305
    %v859 = vunpack.c.h.b16 %v305
    %v860 = vunpack.c.l.b16 %v306
    %v861 = vunpack.c.h.b16 %v306
    %v862 = vunpack.c.l.b16 %v307
    %v863 = vunpack.c.h.b16 %v307
    %v864 = vunpack.c.l.b16 %v308
    %v865 = vunpack.c.h.b16 %v308
    %v866 = vunpack.c.l.b16 %v309
    %v867 = vunpack.c.h.b16 %v309
    %v868 = vunpack.c.l.b16 %v310
    %v869 = vunpack.c.h.b16 %v310
    %v870 = vunpack.c.l.b16 %v311
    %v871 = vunpack.c.h.b16 %v311
    %v872 = vunpack.c.l.b16 %v312
    %v873 = vunpack.c.h.b16 %v312
    %v874 = vunpack.c.l.b16 %v313
    %v875 = vunpack.c.h.b16 %v313
    %v876 = vunpack.c.l.b16 %v314
    %v877 = vunpack.c.h.b16 %v314
    %v878 = vunpack.c.l.b16 %v315
    %v879 = vunpack.c.h.b16 %v315
    %v880 = vunpack.c.l.b16 %v316
    %v881 = vunpack.c.h.b16 %v316
    %v882 = vunpack.c.l.b16 %v317
    %v883 = vunpack.c.h.b16 %v317
    %v884 = vunpack.c.l.b16 %v318
    %v885 = vunpack.c.h.b16 %v318
    %v886 = vunpack.c.l.b16 %v319
    %v887 = vunpack.c.h.b16 %v319
    %v888 = vunpack.c.l.b16 %v320
    %v889 = vunpack.c.h.b16 %v320
    %v890 = vunpack.c.l.b16 %v321
    %v891 = vunpack.c.h.b16 %v321
    %v892 = vunpack.c.l.b16 %v322
    %v893 = vunpack.c.h.b16 %v322
    %v894 = vunpack.c.l.b16 %v323
    %v895 = vunpack.c.h.b16 %v323
    %v896 = vunpack.c.l.b16 %v324
    %v897 = vunpack.c.h.b16 %v324
    %v898 = vunpack.c.l.b16 %v325
    %v899 = vunpack.c.h.b16 %v325
    %v900 = vunpack.c.l.b16 %v326
    %v901 = vunpack.c.h.b16 %v326
    %v902 = vunpack.c.l.b16 %v327
    %v903 = vunpack.c.h.b16 %v327
    %v904 = vunpack.c.l.b16 %v328
    %v905 = vunpack.c.h.b16 %v328
    %v906 = vunpack.c.l.b16 %v329
    %v907 = vunpack.c.h.b16 %v329
    %v908 = vunpack.c.l.b16 %v330
    %v909 = vunpack.c.h.b16 %v330
    %v910 = vunpack.c.l.b16 %v331
    %v911 = vunpack.c.h.b16 %v331
    %v912 = vunpack.c.l.b16 %v332
    %v913 = vunpack.c.h.b16 %v332
    %v914 = vunpack.c.l.b16 %v333
    %v915 = vunpack.c.h.b16 %v333
    %v916 = vunpack.c.l.b16 %v334
    %v917 = vunpack.c.h.b16 %v334
    %v918 = vunpack.c.l.b16 %v335
    %v919 = vunpack.c.h.b16 %v335
    %v920 = vunpack.c.l.b16 %v336
    %v921 = vunpack.c.h.b16 %v336
    %v922 = vunpack.c.l.b16 %v337
    %v923 = vunpack.c.h.b16 %v337
    %v924 = vunpack.c.l.b16 %v338
    %v925 = vunpack.c.h.b16 %v338
    %v926 = vunpack.c.l.b16 %v339
    %v927 = vunpack.c.h.b16 %v339
    %v928 = vunpack.c.l.b16 %v340
    %v929 = vunpack.c.h.b16 %v340
    %v930 = vunpack.c.l.b16 %v341
    %v931 = vunpack.c.h.b16 %v341
    %v932 = vunpack.c.l.b16 %v342
    %v933 = vunpack.c.h.b16 %v342
    %v934 = vunpack.c.l.b16 %v343
    %v935 = vunpack.c.h.b16 %v343
    %v936 = vunpack.c.l.b16 %v344
    %v937 = vunpack.c.h.b16 %v344
    %v938 = vunpack.c.l.b16 %v345
    %v939 = vunpack.c.h.b16 %v345
    %v940 = vunpack.c.l.b16 %v346
    %v941 = vunpack.c.h.b16 %v346
    %v942 = vunpack.c.l.b16 %v347
    %v943 = vunpack.c.h.b16 %v347
    %v944 = vunpack.c.l.b16 %v348
    %v945 = vunpack.c.h.b16 %v348
    %v946 = vunpack.c.l.b16 %v349
    %v947 = vunpack.c.h.b16 %v349
    %v948 = vunpack.c.l.b16 %v350
    %v949 = vunpack.c.h.b16 %v350
    %v950 = vunpack.c.l.b16 %v351
    %v951 = vunpack.c.h.b16 %v351
    %v952 = vunpack.c.l.b16 %v352
    %v953 = vunpack.c.h.b16 %v352
    %v954 = vunpack.c.l.b16 %v353
    %v955 = vunpack.c.h.b16 %v353
    %v956 = vunpack.c.l.b16 %v354
    %v957 = vunpack.c.h.b16 %v354
    %v958 = vunpack.c.l.b16 %v355
    %v959 = vunpack.c.h.b16 %v355
    %v960 = vunpack.c.l.b16 %v356
    %v961 = vunpack.c.h.b16 %v356
    %v962 = vunpack.c.l.b16 %v357
    %v963 = vunpack.c.h.b16 %v357
    %v964 = vunpack.c.l.b16 %v358
    %v965 = vunpack.c.h.b16 %v358
    %v966 = vunpack.c.l.b16 %v359
    %v967 = vunpack.c.h.b16 %v359
    %v968 = vunpack.c.l.b16 %v360
    %v969 = vunpack.c.h.b16 %v360
    %v970 = vunpack.c.l.b16 %v361
    %v971 = vunpack.c.h.b16 %v361
    %v972 = vpack.c.b16 %v584, %v580
    %v973 = vpack.c.b16 %v585, %v581
    %v974 = vpack.c.b16 %v586, %v582
    %v975 = vpack.c.b16 %v587, %v583
    %v976 = vpack.c.b16 %v592, %v588
    %v977 = vpack.c.b16 %v593, %v589
    %v978 = vpack.c.b16 %v594, %v590
    %v979 = vpack.c.b16 %v595, %v591
    %v980 = vpack.c.b16 %v600, %v596
    %v981 = vpack.c.b16 %v601, %v597
    %v982 = vpack.c.b16 %v602, %v598
    %v983 = vpack.c.b16 %v603, %v599
    %v984 = vpack.c.b16 %v608, %v604
    %v985 = vpack.c.b16 %v609, %v605
    %v986 = vpack.c.b16 %v610, %v606
    %v987 = vpack.c.b16 %v611, %v607
    %v988 = vpack.c.b16 %v616, %v612
    %v989 = vpack.c.b16 %v617, %v613
    %v990 = vpack.c.b16 %v618, %v614
    %v991 = vpack.c.b16 %v619, %v615
    %v992 = vpack.c.b16 %v624, %v620
    %v993 = vpack.c.b16 %v625, %v621
    %v994 = vpack.c.b16 %v626, %v622
    %v995 = vpack.c.b16 %v627, %v623
    %v996 = vpack.c.b16 %v632, %v628
    %v997 = vpack.c.b16 %v633, %v629
    %v998 = vpack.c.b16 %v634, %v630
    %v999 = vpack.c.b16 %v635, %v631
    %v1000 = vpack.c.b16 %v640, %v636
    %v1001 = vpack.c.b16 %v641, %v637
    %v1002 = vpack.c.b16 %v642, %v638
    %v1003 = vpack.c.b16 %v643, %v639
    %v1004 = vpack.c.b16 %v648, %v644
    %v1005 = vpack.c.b16 %v649, %v645
    %v1006 = vpack.c.b16 %v650, %v646
    %v1007 = vpack.c.b16 %v651, %v647
    %v1008 = vpack.c.b16 %v656, %v652
    %v1009 = vpack.c.b16 %v657, %v653
    %v1010 = vpack.c.b16 %v658, %v654
    %v1011 = vpack.c.b16 %v659, %v655
    %v1012 = vpack.c.b16 %v664, %v660
    %v1013 = vpack.c.b16 %v665, %v661
    %v1014 = vpack.c.b16 %v666, %v662
    %v1015 = vpack.c.b16 %v667, %v663
    %v1016 = vpack.c.b16 %v672, %v668
    %v1017 = vpack.c.b16 %v673, %v669
    %v1018 = vpack.c.b16 %v674, %v670
    %v1019 = vpack.c.b16 %v675, %v671
    %v1020 = vpack.c.b16 %v680, %v676
    %v1021 = vpack.c.b16 %v681, %v677
    %v1022 = vpack.c.b16 %v682, %v678
    %v1023 = vpack.c.b16 %v683, %v679
    %v1024 = vpack.c.b16 %v688, %v684
    %v1025 = vpack.c.b16 %v689, %v685
    %v1026 = vpack.c.b16 %v690, %v686
    %v1027 = vpack.c.b16 %v691, %v687
    %v1028 = vpack.c.b16 %v696, %v692
    %v1029 = vpack.c.b16 %v697, %v693
    %v1030 = vpack.c.b16 %v698, %v694
    %v1031 = vpack.c.b16 %v699, %v695
    %v1032 = vpack.c.b16 %v704, %v700
    %v1033 = vpack.c.b16 %v705, %v701
    %v1034 = vpack.c.b16 %v706, %v702
    %v1035 = vpack.c.b16 %v707, %v703
    %v1036 = vpack.c.b16 %v712, %v708
    %v1037 = vpack.c.b16 %v713, %v709
    %v1038 = vpack.c.b16 %v714, %v710
    %v1039 = vpack.c.b16 %v715, %v711
    %v1040 = vpack.c.b16 %v720, %v716
    %v1041 = vpack.c.b16 %v721, %v717
    %v1042 = vpack.c.b16 %v722, %v718
    %v1043 = vpack.c.b16 %v723, %v719
    %v1044 = vpack.c.b16 %v728, %v724
    %v1045 = vpack.c.b16 %v729, %v725
    %v1046 = vpack.c.b16 %v730, %v726
    %v1047 = vpack.c.b16 %v731, %v727
    %v1048 = vpack.c.b16 %v736, %v732
    %v1049 = vpack.c.b16 %v737, %v733
    %v1050 = vpack.c.b16 %v738, %v734
    %v1051 = vpack.c.b16 %v739, %v735
    %v1052 = vpack.c.b16 %v744, %v740
    %v1053 = vpack.c.b16 %v745, %v741
    %v1054 = vpack.c.b16 %v746, %v742
    %v1055 = vpack.c.b16 %v747, %v743
    %v1056 = vpack.c.b16 %v752, %v748
    %v1057 = vpack.c.b16 %v753, %v749
    %v1058 = vpack.c.b16 %v754, %v750
    %v1059 = vpack.c.b16 %v755, %v751
    %v1060 = vpack.c.b16 %v760, %v756
    %v1061 = vpack.c.b16 %v761, %v757
    %v1062 = vpack.c.b16 %v762, %v758
    %v1063 = vpack.c.b16 %v763, %v759
    %v1064 = vpack.c.b16 %v768, %v764
    %v1065 = vpack.c.b16 %v769, %v765
    %v1066 = vpack.c.b16 %v770, %v766
    %v1067 = vpack.c.b16 %v771, %v767
    %v1068 = vpack.c.b16 %v776, %v772
    %v1069 = vpack.c.b16 %v777, %v773
    %v1070 = vpack.c.b16 %v778, %v774
    %v1071 = vpack.c.b16 %v779, %v775
    %v1072 = vpack.c.b16 %v784, %v780
    %v1073 = vpack.c.b16 %v785, %v781
    %v1074 = vpack.c.b16 %v786, %v782
    %v1075 = vpack.c.b16 %v787, %v783
    %v1076 = vpack.c.b16 %v792, %v788
    %v1077 = vpack.c.b16 %v793, %v789
    %v1078 = vpack.c.b16 %v794, %v790
    %v1079 = vpack.c.b16 %v795, %v791
    %v1080 = vpack.c.b16 %v800, %v796
    %v1081 = vpack.c.b16 %v801, %v797
    %v1082 = vpack.c.b16 %v802, %v798
    %v1083 = vpack.c.b16 %v803, %v799
    %v1084 = vpack.c.b16 %v808, %v804
    %v1085 = vpack.c.b16 %v809, %v805
    %v1086 = vpack.c.b16 %v810, %v806
    %v1087 = vpack.c.b16 %v811, %v807
    %v1088 = vpack.c.b16 %v816, %v812
    %v1089 = vpack.c.b16 %v817, %v813
    %v1090 = vpack.c.b16 %v818, %v814
    %v1091 = vpack.c.b16 %v819, %v815
    %v1092 = vpack.c.b16 %v824, %v820
    %v1093 = vpack.c.b16 %v825, %v821
    %v1094 = vpack.c.b16 %v826, %v822
    %v1095 = vpack.c.b16 %v827, %v823
    %v1096 = vpack.c.b16 %v832, %v828
    %v1097 = vpack.c.b16 %v833, %v829
    %v1098 = vpack.c.b16 %v834, %v830
    %v1099 = vpack.c.b16 %v835, %v831
    %v1100 = vpack.c.b16 %v840, %v836
    %v1101 = vpack.c.b16 %v841, %v837
    %v1102 = vpack.c.b16 %v842, %v838
    %v1103 = vpack.c.b16 %v843, %v839
    %v1104 = vpack.c.b16 %v848, %v844
    %v1105 = vpack.c.b16 %v849, %v845
    %v1106 = vpack.c.b16 %v850, %v846
    %v1107 = vpack.c.b16 %v851, %v847
    %v1108 = vpack.c.b16 %v856, %v852
    %v1109 = vpack.c.b16 %v857, %v853
    %v1110 = vpack.c.b16 %v858, %v854
    %v1111 = vpack.c.b16 %v859, %v855
    %v1112 = vpack.c.b16 %v864, %v860
    %v1113 = vpack.c.b16 %v865, %v861
    %v1114 = vpack.c.b16 %v866, %v862
    %v1115 = vpack.c.b16 %v867, %v863
    %v1116 = vpack.c.b16 %v872, %v868
    %v1117 = vpack.c.b16 %v873, %v869
    %v1118 = vpack.c.b16 %v874, %v870
    %v1119 = vpack.c.b16 %v875, %v871
    %v1120 = vpack.c.b16 %v880, %v876
    %v1121 = vpack.c.b16 %v881, %v877
    %v1122 = vpack.c.b16 %v882, %v878
    %v1123 = vpack.c.b16 %v883, %v879
    %v1124 = vpack.c.b16 %v888, %v884
    %v1125 = vpack.c.b16 %v889, %v885
    %v1126 = vpack.c.b16 %v890, %v886
    %v1127 = vpack.c.b16 %v891, %v887
    %v1128 = vpack.c.b16 %v896, %v892
    %v1129 = vpack.c.b16 %v897, %v893
    %v1130 = vpack.c.b16 %v898, %v894
    %v1131 = vpack.c.b16 %v899, %v895
    %v1132 = vpack.c.b16 %v904, %v900
    %v1133 = vpack.c.b16 %v905, %v901
    %v1134 = vpack.c.b16 %v906, %v902
    %v1135 = vpack.c.b16 %v907, %v903
    %v1136 = vpack.c.b16 %v912, %v908
    %v1137 = vpack.c.b16 %v913, %v909
    %v1138 = vpack.c.b16 %v914, %v910
    %v1139 = vpack.c.b16 %v915, %v911
    %v1140 = vpack.c.b16 %v920, %v916
    %v1141 = vpack.c.b16 %v921, %v917
    %v1142 = vpack.c.b16 %v922, %v918
    %v1143 = vpack.c.b16 %v923, %v919
    %v1144 = vpack.c.b16 %v928, %v924
    %v1145 = vpack.c.b16 %v929, %v925
    %v1146 = vpack.c.b16 %v930, %v926
    %v1147 = vpack.c.b16 %v931, %v927
    %v1148 = vpack.c.b16 %v936, %v932
    %v1149 = vpack.c.b16 %v937, %v933
    %v1150 = vpack.c.b16 %v938, %v934
    %v1151 = vpack.c.b16 %v939, %v935
    %v1152 = vpack.c.b16 %v944, %v940
    %v1153 = vpack.c.b16 %v945, %v941
    %v1154 = vpack.c.b16 %v946, %v942
    %v1155 = vpack.c.b16 %v947, %v943
    %v1156 = vpack.c.b16 %v952, %v948
    %v1157 = vpack.c.b16 %v953, %v949
    %v1158 = vpack.c.b16 %v954, %v950
    %v1159 = vpack.c.b16 %v955, %v951
    %v1160 = vpack.c.b16 %v960, %v956
    %v1161 = vpack.c.b16 %v961, %v957
    %v1162 = vpack.c.b16 %v962, %v958
    %v1163 = vpack.c.b16 %v963, %v959
    %v1164 = vpack.c.b16 %v968, %v964
    %v1165 = vpack.c.b16 %v969, %v965
    %v1166 = vpack.c.b16 %v970, %v966
    %v1167 = vpack.c.b16 %v971, %v967
    %vm1364 = vcmask 130048
    %v1366 = vsel %vm1364, %v144, 0
    %v1369 = vsel %vm1364, %v151, 0
    %v1372 = vsel %vm1364, %v158, 0
    %v1375 = vsel %vm1364, %v165, 0
    %1377 = vmatprep.subr.bf16.mxu0 %v973
    %1378 = vmatpush1.bf16.msra.mxu0 %v972
    %1379 = vmatprep.subr.bf16.mxu0 %v977
    %1380 = vmatpush1.bf16.msra.mxu0 %v976
    %1381 = vmatprep.subr.bf16.mxu0 %v981
    %1382 = vmatpush1.bf16.msra.mxu0 %v980
    %1383 = vmatprep.subr.bf16.mxu0 %v985
    %1384 = vmatpush1.bf16.msra.mxu0 %v984
    %1385 = vmatprep.subr.bf16.mxu0 %v989
    %1386 = vmatpush1.bf16.msra.mxu0 %v988
    %1387 = vmatprep.subr.bf16.mxu0 %v993
    %1388 = vmatpush1.bf16.msra.mxu0 %v992
    %1389 = vmatprep.subr.bf16.mxu0 %v997
    %1390 = vmatpush1.bf16.msra.mxu0 %v996
    %1391 = vmatprep.subr.bf16.mxu0 %v1001
    %1392 = vmatpush1.bf16.msra.mxu0 %v1000
    %1393 = vmatprep.subr.bf16.mxu0 %v1005
    %1394 = vmatpush1.bf16.msra.mxu0 %v1004
    %1395 = vmatprep.subr.bf16.mxu0 %v1009
    %1396 = vmatpush1.bf16.msra.mxu0 %v1008
    %1397 = vmatprep.subr.bf16.mxu0 %v1013
    %1398 = vmatpush1.bf16.msra.mxu0 %v1012
    %1399 = vmatprep.subr.bf16.mxu0 %v1017
    %1400 = vmatpush1.bf16.msra.mxu0 %v1016
    %1401 = vmatprep.subr.bf16.mxu0 %v1021
    %1402 = vmatpush1.bf16.msra.mxu0 %v1020
    %1403 = vmatprep.subr.bf16.mxu0 %v1025
    %1404 = vmatpush1.bf16.msra.mxu0 %v1024
    %1405 = vmatprep.subr.bf16.mxu0 %v1029
    %1406 = vmatpush1.bf16.msra.mxu0 %v1028
    %1407 = vmatprep.subr.bf16.mxu0 %v1033
    %1408 = vmatpush1.bf16.msra.mxu0 %v1032
    %1409 = vmatprep.mubr.bf16.mxu0 %v139
    %1410 = vmatmul.mubr.bf16.gmra.mrb[0].mxu0 %v138
    %v1411 = vpop.f32.mrb[0].mxu0
    %v1412 = vadd.f32 %v367, %v1411
    %v1413 = vpop.f32.mrb[0].mxu0
    %v1414 = vadd.f32 %v371, %v1413
    %v1415 = vpop.f32.mrb[0].mxu0
    %v1416 = vadd.f32 %v367, %v1415
    %v1417 = vpop.f32.mrb[0].mxu0
    %v1418 = vadd.f32 %v371, %v1417
    %1419 = vmatprep.mubr.bf16.mxu0 %v146
    %1420 = vmatmul.mubr.bf16.gmra.mrb[0].mxu0 %v145
    %v1421 = vpop.f32.mrb[0].mxu0
    %v1422 = vadd.f32 %v367, %v1421
    %v1423 = vpop.f32.mrb[0].mxu0
    %v1424 = vadd.f32 %v371, %v1423
    %v1425 = vpop.f32.mrb[0].mxu0
    %v1426 = vadd.f32 %v367, %v1425
    %v1427 = vpop.f32.mrb[0].mxu0
    %v1428 = vadd.f32 %v371, %v1427
    %1429 = vmatprep.mubr.bf16.mxu0 %v153
    %1430 = vmatmul.mubr.bf16.gmra.mrb[0].mxu0 %v152
    %v1431 = vpop.f32.mrb[0].mxu0
    %v1432 = vadd.f32 %v367, %v1431
    %v1433 = vpop.f32.mrb[0].mxu0
    %v1434 = vadd.f32 %v371, %v1433
    %v1435 = vpop.f32.mrb[0].mxu0
    %v1436 = vadd.f32 %v367, %v1435
    %v1437 = vpop.f32.mrb[0].mxu0
    %v1438 = vadd.f32 %v371, %v1437
    %1439 = vmatprep.mubr.bf16.mxu0 %v160
    %1440 = vmatmul.mubr.bf16.gmra.mrb[0].mxu0 %v159
    %v1441 = vpop.f32.mrb[0].mxu0
    %v1442 = vadd.f32 %v367, %v1441
    %v1443 = vpop.f32.mrb[0].mxu0
    %v1444 = vadd.f32 %v371, %v1443
    %v1445 = vpop.f32.mrb[0].mxu0
    %v1446 = vadd.f32 %v367, %v1445
    %v1447 = vpop.f32.mrb[0].mxu0
    %v1448 = vadd.f32 %v371, %v1447
    %1449 = vdwg.mxu0
    %1450 = vmatprep.subr.bf16.mxu0 %v1037
    %1451 = vmatpush1.bf16.msra.mxu0 %v1036
    %1452 = vmatprep.subr.bf16.mxu0 %v1041
    %1453 = vmatpush1.bf16.msra.mxu0 %v1040
    %1454 = vmatprep.subr.bf16.mxu0 %v1045
    %1455 = vmatpush1.bf16.msra.mxu0 %v1044
    %1456 = vmatprep.subr.bf16.mxu0 %v1049
    %1457 = vmatpush1.bf16.msra.mxu0 %v1048
    %1458 = vmatprep.subr.bf16.mxu0 %v1053
    %1459 = vmatpush1.bf16.msra.mxu0 %v1052
    %1460 = vmatprep.subr.bf16.mxu0 %v1057
    %1461 = vmatpush1.bf16.msra.mxu0 %v1056
    %1462 = vmatprep.subr.bf16.mxu0 %v1061
    %1463 = vmatpush1.bf16.msra.mxu0 %v1060
    %1464 = vmatprep.subr.bf16.mxu0 %v1065
    %1465 = vmatpush1.bf16.msra.mxu0 %v1064
    %1466 = vmatprep.subr.bf16.mxu0 %v1069
    %1467 = vmatpush1.bf16.msra.mxu0 %v1068
    %1468 = vmatprep.subr.bf16.mxu0 %v1073
    %1469 = vmatpush1.bf16.msra.mxu0 %v1072
    %1470 = vmatprep.subr.bf16.mxu0 %v1077
    %1471 = vmatpush1.bf16.msra.mxu0 %v1076
    %1472 = vmatprep.subr.bf16.mxu0 %v1081
    %1473 = vmatpush1.bf16.msra.mxu0 %v1080
    %1474 = vmatprep.subr.bf16.mxu0 %v1085
    %1475 = vmatpush1.bf16.msra.mxu0 %v1084
    %1476 = vmatprep.subr.bf16.mxu0 %v1089
    %1477 = vmatpush1.bf16.msra.mxu0 %v1088
    %1478 = vmatprep.subr.bf16.mxu0 %v1093
    %1479 = vmatpush1.bf16.msra.mxu0 %v1092
    %1480 = vmatprep.subr.bf16.mxu0 %v1097
    %1481 = vmatpush1.bf16.msra.mxu0 %v1096
    %1482 = vmatprep.mubr.bf16.mxu0 %v141
    %1483 = vmatmul.mubr.bf16.gmra.mrb[0].mxu0 %v140
    %v1484 = vpop.f32.mrb[0].mxu0
    %v1485 = vadd.f32 %v1412, %v1484
    %v1486 = vpop.f32.mrb[0].mxu0
    %v1487 = vadd.f32 %v1414, %v1486
    %v1488 = vpop.f32.mrb[0].mxu0
    %v1489 = vadd.f32 %v1416, %v1488
    %v1490 = vpop.f32.mrb[0].mxu0
    %v1491 = vadd.f32 %v1418, %v1490
    %1492 = vmatprep.mubr.bf16.mxu0 %v148
    %1493 = vmatmul.mubr.bf16.gmra.mrb[0].mxu0 %v147
    %v1494 = vpop.f32.mrb[0].mxu0
    %v1495 = vadd.f32 %v1422, %v1494
    %v1496 = vpop.f32.mrb[0].mxu0
    %v1497 = vadd.f32 %v1424, %v1496
    %v1498 = vpop.f32.mrb[0].mxu0
    %v1499 = vadd.f32 %v1426, %v1498
    %v1500 = vpop.f32.mrb[0].mxu0
    %v1501 = vadd.f32 %v1428, %v1500
    %1502 = vmatprep.mubr.bf16.mxu0 %v155
    %1503 = vmatmul.mubr.bf16.gmra.mrb[0].mxu0 %v154
    %v1504 = vpop.f32.mrb[0].mxu0
    %v1505 = vadd.f32 %v1432, %v1504
    %v1506 = vpop.f32.mrb[0].mxu0
    %v1507 = vadd.f32 %v1434, %v1506
    %v1508 = vpop.f32.mrb[0].mxu0
    %v1509 = vadd.f32 %v1436, %v1508
    %v1510 = vpop.f32.mrb[0].mxu0
    %v1511 = vadd.f32 %v1438, %v1510
    %1512 = vmatprep.mubr.bf16.mxu0 %v162
    %1513 = vmatmul.mubr.bf16.gmra.mrb[0].mxu0 %v161
    %v1514 = vpop.f32.mrb[0].mxu0
    %v1515 = vadd.f32 %v1442, %v1514
    %v1516 = vpop.f32.mrb[0].mxu0
    %v1517 = vadd.f32 %v1444, %v1516
    %v1518 = vpop.f32.mrb[0].mxu0
    %v1519 = vadd.f32 %v1446, %v1518
    %v1520 = vpop.f32.mrb[0].mxu0
    %v1521 = vadd.f32 %v1448, %v1520
    %1522 = vdwg.mxu0
    %1523 = vmatprep.subr.bf16.mxu0 %v1101
    %1524 = vmatpush1.bf16.msra.mxu0 %v1100
    %1525 = vmatprep.subr.bf16.mxu0 %v1105
    %1526 = vmatpush1.bf16.msra.mxu0 %v1104
    %1527 = vmatprep.subr.bf16.mxu0 %v1109
    %1528 = vmatpush1.bf16.msra.mxu0 %v1108
    %1529 = vmatprep.subr.bf16.mxu0 %v1113
    %1530 = vmatpush1.bf16.msra.mxu0 %v1112
    %1531 = vmatprep.subr.bf16.mxu0 %v1117
    %1532 = vmatpush1.bf16.msra.mxu0 %v1116
    %1533 = vmatprep.subr.bf16.mxu0 %v1121
    %1534 = vmatpush1.bf16.msra.mxu0 %v1120
    %1535 = vmatprep.subr.bf16.mxu0 %v1125
    %1536 = vmatpush1.bf16.msra.mxu0 %v1124
    %1537 = vmatprep.subr.bf16.mxu0 %v1129
    %1538 = vmatpush1.bf16.msra.mxu0 %v1128
    %1539 = vmatprep.subr.bf16.mxu0 %v1133
    %1540 = vmatpush1.bf16.msra.mxu0 %v1132
    %1541 = vmatprep.subr.bf16.mxu0 %v1137
    %1542 = vmatpush1.bf16.msra.mxu0 %v1136
    %1543 = vmatprep.subr.bf16.mxu0 %v1141
    %1544 = vmatpush1.bf16.msra.mxu0 %v1140
    %1545 = vmatprep.subr.bf16.mxu0 %v1145
    %1546 = vmatpush1.bf16.msra.mxu0 %v1144
    %1547 = vmatprep.subr.bf16.mxu0 %v1149
    %1548 = vmatpush1.bf16.msra.mxu0 %v1148
    %1549 = vmatprep.subr.bf16.mxu0 %v1153
    %1550 = vmatpush1.bf16.msra.mxu0 %v1152
    %1551 = vmatprep.subr.bf16.mxu0 %v1157
    %1552 = vmatpush1.bf16.msra.mxu0 %v1156
    %1553 = vmatprep.subr.bf16.mxu0 %v1161
    %1554 = vmatpush1.bf16.msra.mxu0 %v1160
    %1555 = vmatprep.mubr.bf16.mxu0 %v143
    %1556 = vmatmul.mubr.bf16.gmra.mrb[0].mxu0 %v142
    %v1557 = vpop.f32.mrb[0].mxu0
    %v1558 = vadd.f32 %v1485, %v1557
    %v1559 = vpop.f32.mrb[0].mxu0
    %v1560 = vadd.f32 %v1487, %v1559
    %v1561 = vpop.f32.mrb[0].mxu0
    %v1562 = vadd.f32 %v1489, %v1561
    %v1563 = vpop.f32.mrb[0].mxu0
    %v1564 = vadd.f32 %v1491, %v1563
    %1565 = vmatprep.mubr.bf16.mxu0 %v150
    %1566 = vmatmul.mubr.bf16.gmra.mrb[0].mxu0 %v149
    %v1567 = vpop.f32.mrb[0].mxu0
    %v1568 = vadd.f32 %v1495, %v1567
    %v1569 = vpop.f32.mrb[0].mxu0
    %v1570 = vadd.f32 %v1497, %v1569
    %v1571 = vpop.f32.mrb[0].mxu0
    %v1572 = vadd.f32 %v1499, %v1571
    %v1573 = vpop.f32.mrb[0].mxu0
    %v1574 = vadd.f32 %v1501, %v1573
    %1575 = vmatprep.mubr.bf16.mxu0 %v157
    %1576 = vmatmul.mubr.bf16.gmra.mrb[0].mxu0 %v156
    %v1577 = vpop.f32.mrb[0].mxu0
    %v1578 = vadd.f32 %v1505, %v1577
    %v1579 = vpop.f32.mrb[0].mxu0
    %v1580 = vadd.f32 %v1507, %v1579
    %v1581 = vpop.f32.mrb[0].mxu0
    %v1582 = vadd.f32 %v1509, %v1581
    %v1583 = vpop.f32.mrb[0].mxu0
    %v1584 = vadd.f32 %v1511, %v1583
    %1585 = vmatprep.mubr.bf16.mxu0 %v164
    %1586 = vmatmul.mubr.bf16.gmra.mrb[0].mxu0 %v163
    %v1587 = vpop.f32.mrb[0].mxu0
    %v1588 = vadd.f32 %v1515, %v1587
    %v1589 = vpop.f32.mrb[0].mxu0
    %v1590 = vadd.f32 %v1517, %v1589
    %v1591 = vpop.f32.mrb[0].mxu0
    %v1592 = vadd.f32 %v1519, %v1591
    %v1593 = vpop.f32.mrb[0].mxu0
    %v1594 = vadd.f32 %v1521, %v1593
    %1595 = vdwg.mxu0
    %1596 = vmatprep.subr.bf16.mxu0 %v1165
    %1597 = vmatpush1.bf16.msra.mxu0 %v1164
    %1598 = vmatprep.subr.bf16.mxu0 0
    %1599 = vmatpush1.bf16.msra.mxu0 0
    %1600 = vmatprep.subr.bf16.mxu0 0
    %1601 = vmatpush1.bf16.msra.mxu0 0
    %1602 = vmatprep.subr.bf16.mxu0 0
    %1603 = vmatpush1.bf16.msra.mxu0 0
    %1604 = vmatprep.subr.bf16.mxu0 0
    %1605 = vmatpush1.bf16.msra.mxu0 0
    %1606 = vmatprep.subr.bf16.mxu0 0
    %1607 = vmatpush1.bf16.msra.mxu0 0
    %1608 = vmatprep.subr.bf16.mxu0 0
    %1609 = vmatpush1.bf16.msra.mxu0 0
    %1610 = vmatprep.subr.bf16.mxu0 0
    %1611 = vmatpush1.bf16.msra.mxu0 0
    %1612 = vmatprep.subr.bf16.mxu0 0
    %1613 = vmatpush1.bf16.msra.mxu0 0
    %1614 = vmatprep.subr.bf16.mxu0 0
    %1615 = vmatpush1.bf16.msra.mxu0 0
    %1616 = vmatprep.subr.bf16.mxu0 0
    %1617 = vmatpush1.bf16.msra.mxu0 0
    %1618 = vmatprep.subr.bf16.mxu0 0
    %1619 = vmatpush1.bf16.msra.mxu0 0
    %1620 = vmatprep.subr.bf16.mxu0 0
    %1621 = vmatpush1.bf16.msra.mxu0 0
    %1622 = vmatprep.subr.bf16.mxu0 0
    %1623 = vmatpush1.bf16.msra.mxu0 0
    %1624 = vmatprep.subr.bf16.mxu0 0
    %1625 = vmatpush1.bf16.msra.mxu0 0
    %1626 = vmatprep.subr.bf16.mxu0 0
    %1627 = vmatpush1.bf16.msra.mxu0 0
    %1628 = vmatprep.mubr.bf16.mxu0 0
    %1629 = vmatmul.mubr.bf16.gmra.mrb[0].mxu0 %v1366
    %v1630 = vpop.f32.mrb[0].mxu0
    %v1631 = vadd.f32 %v1558, %v1630
    %v1632 = vpop.f32.mrb[0].mxu0
    %v1633 = vadd.f32 %v1560, %v1632
    %v1634 = vpop.f32.mrb[0].mxu0
    %v1635 = vadd.f32 %v1562, %v1634
    %v1636 = vpop.f32.mrb[0].mxu0
    %v1637 = vadd.f32 %v1564, %v1636
    %1638 = vmatprep.mubr.bf16.mxu0 0
    %1639 = vmatmul.mubr.bf16.gmra.mrb[0].mxu0 %v1369
    %v1640 = vpop.f32.mrb[0].mxu0
    %v1641 = vadd.f32 %v1568, %v1640
    %v1642 = vpop.f32.mrb[0].mxu0
    %v1643 = vadd.f32 %v1570, %v1642
    %v1644 = vpop.f32.mrb[0].mxu0
    %v1645 = vadd.f32 %v1572, %v1644
    %v1646 = vpop.f32.mrb[0].mxu0
    %v1647 = vadd.f32 %v1574, %v1646
    %1648 = vmatprep.mubr.bf16.mxu0 0
    %1649 = vmatmul.mubr.bf16.gmra.mrb[0].mxu0 %v1372
    %v1650 = vpop.f32.mrb[0].mxu0
    %v1651 = vadd.f32 %v1578, %v1650
    %v1652 = vpop.f32.mrb[0].mxu0
    %v1653 = vadd.f32 %v1580, %v1652
    %v1654 = vpop.f32.mrb[0].mxu0
    %v1655 = vadd.f32 %v1582, %v1654
    %v1656 = vpop.f32.mrb[0].mxu0
    %v1657 = vadd.f32 %v1584, %v1656
    %1658 = vmatprep.mubr.bf16.mxu0 0
    %1659 = vmatmul.mubr.bf16.gmra.mrb[0].mxu0 %v1375
    %v1660 = vpop.f32.mrb[0].mxu0
    %v1661 = vadd.f32 %v1588, %v1660
    %v1662 = vpop.f32.mrb[0].mxu0
    %v1663 = vadd.f32 %v1590, %v1662
    %v1664 = vpop.f32.mrb[0].mxu0
    %v1665 = vadd.f32 %v1592, %v1664
    %v1666 = vpop.f32.mrb[0].mxu0
    %v1667 = vadd.f32 %v1594, %v1666
    %1668 = vdwg.mxu0
    %1669 = vmatprep.subr.bf16.mxu0 %v975
    %1670 = vmatpush1.bf16.msra.mxu0 %v974
    %1671 = vmatprep.subr.bf16.mxu0 %v979
    %1672 = vmatpush1.bf16.msra.mxu0 %v978
    %1673 = vmatprep.subr.bf16.mxu0 %v983
    %1674 = vmatpush1.bf16.msra.mxu0 %v982
    %1675 = vmatprep.subr.bf16.mxu0 %v987
    %1676 = vmatpush1.bf16.msra.mxu0 %v986
    %1677 = vmatprep.subr.bf16.mxu0 %v991
    %1678 = vmatpush1.bf16.msra.mxu0 %v990
    %1679 = vmatprep.subr.bf16.mxu0 %v995
    %1680 = vmatpush1.bf16.msra.mxu0 %v994
    %1681 = vmatprep.subr.bf16.mxu0 %v999
    %1682 = vmatpush1.bf16.msra.mxu0 %v998
    %1683 = vmatprep.subr.bf16.mxu0 %v1003
    %1684 = vmatpush1.bf16.msra.mxu0 %v1002
    %1685 = vmatprep.subr.bf16.mxu0 %v1007
    %1686 = vmatpush1.bf16.msra.mxu0 %v1006
    %1687 = vmatprep.subr.bf16.mxu0 %v1011
    %1688 = vmatpush1.bf16.msra.mxu0 %v1010
    %1689 = vmatprep.subr.bf16.mxu0 %v1015
    %1690 = vmatpush1.bf16.msra.mxu0 %v1014
    %1691 = vmatprep.subr.bf16.mxu0 %v1019
    %1692 = vmatpush1.bf16.msra.mxu0 %v1018
    %1693 = vmatprep.subr.bf16.mxu0 %v1023
    %1694 = vmatpush1.bf16.msra.mxu0 %v1022
    %1695 = vmatprep.subr.bf16.mxu0 %v1027
    %1696 = vmatpush1.bf16.msra.mxu0 %v1026
    %1697 = vmatprep.subr.bf16.mxu0 %v1031
    %1698 = vmatpush1.bf16.msra.mxu0 %v1030
    %1699 = vmatprep.subr.bf16.mxu0 %v1035
    %1700 = vmatpush1.bf16.msra.mxu0 %v1034
    %1701 = vmatprep.mubr.bf16.mxu0 %v139
    %1702 = vmatmul.mubr.bf16.gmra.mrb[0].mxu0 %v138
    %v1703 = vpop.f32.mrb[0].mxu0
    %v1704 = vadd.f32 %v375, %v1703
    %v1705 = vpop.f32.mrb[0].mxu0
    %v1706 = vadd.f32 %v379, %v1705
    %v1707 = vpop.f32.mrb[0].mxu0
    %v1708 = vadd.f32 %v375, %v1707
    %v1709 = vpop.f32.mrb[0].mxu0
    %v1710 = vadd.f32 %v379, %v1709
    %1711 = vmatprep.mubr.bf16.mxu0 %v146
    %1712 = vmatmul.mubr.bf16.gmra.mrb[0].mxu0 %v145
    %v1713 = vpop.f32.mrb[0].mxu0
    %v1714 = vadd.f32 %v375, %v1713
    %v1715 = vpop.f32.mrb[0].mxu0
    %v1716 = vadd.f32 %v379, %v1715
    %v1717 = vpop.f32.mrb[0].mxu0
    %v1718 = vadd.f32 %v375, %v1717
    %v1719 = vpop.f32.mrb[0].mxu0
    %v1720 = vadd.f32 %v379, %v1719
    %1721 = vmatprep.mubr.bf16.mxu0 %v153
    %1722 = vmatmul.mubr.bf16.gmra.mrb[0].mxu0 %v152
    %v1723 = vpop.f32.mrb[0].mxu0
    %v1724 = vadd.f32 %v375, %v1723
    %v1725 = vpop.f32.mrb[0].mxu0
    %v1726 = vadd.f32 %v379, %v1725
    %v1727 = vpop.f32.mrb[0].mxu0
    %v1728 = vadd.f32 %v375, %v1727
    %v1729 = vpop.f32.mrb[0].mxu0
    %v1730 = vadd.f32 %v379, %v1729
    %1731 = vmatprep.mubr.bf16.mxu0 %v160
    %1732 = vmatmul.mubr.bf16.gmra.mrb[0].mxu0 %v159
    %v1733 = vpop.f32.mrb[0].mxu0
    %v1734 = vadd.f32 %v375, %v1733
    %v1735 = vpop.f32.mrb[0].mxu0
    %v1736 = vadd.f32 %v379, %v1735
    %v1737 = vpop.f32.mrb[0].mxu0
    %v1738 = vadd.f32 %v375, %v1737
    %v1739 = vpop.f32.mrb[0].mxu0
    %v1740 = vadd.f32 %v379, %v1739
    %1741 = vdwg.mxu0
    %1742 = vmatprep.subr.bf16.mxu0 %v1039
    %1743 = vmatpush1.bf16.msra.mxu0 %v1038
    %1744 = vmatprep.subr.bf16.mxu0 %v1043
    %1745 = vmatpush1.bf16.msra.mxu0 %v1042
    %1746 = vmatprep.subr.bf16.mxu0 %v1047
    %1747 = vmatpush1.bf16.msra.mxu0 %v1046
    %1748 = vmatprep.subr.bf16.mxu0 %v1051
    %1749 = vmatpush1.bf16.msra.mxu0 %v1050
    %1750 = vmatprep.subr.bf16.mxu0 %v1055
    %1751 = vmatpush1.bf16.msra.mxu0 %v1054
    %1752 = vmatprep.subr.bf16.mxu0 %v1059
    %1753 = vmatpush1.bf16.msra.mxu0 %v1058
    %1754 = vmatprep.subr.bf16.mxu0 %v1063
    %1755 = vmatpush1.bf16.msra.mxu0 %v1062
    %1756 = vmatprep.subr.bf16.mxu0 %v1067
    %1757 = vmatpush1.bf16.msra.mxu0 %v1066
    %1758 = vmatprep.subr.bf16.mxu0 %v1071
    %1759 = vmatpush1.bf16.msra.mxu0 %v1070
    %1760 = vmatprep.subr.bf16.mxu0 %v1075
    %1761 = vmatpush1.bf16.msra.mxu0 %v1074
    %1762 = vmatprep.subr.bf16.mxu0 %v1079
    %1763 = vmatpush1.bf16.msra.mxu0 %v1078
    %1764 = vmatprep.subr.bf16.mxu0 %v1083
    %1765 = vmatpush1.bf16.msra.mxu0 %v1082
    %1766 = vmatprep.subr.bf16.mxu0 %v1087
    %1767 = vmatpush1.bf16.msra.mxu0 %v1086
    %1768 = vmatprep.subr.bf16.mxu0 %v1091
    %1769 = vmatpush1.bf16.msra.mxu0 %v1090
    %1770 = vmatprep.subr.bf16.mxu0 %v1095
    %1771 = vmatpush1.bf16.msra.mxu0 %v1094
    %1772 = vmatprep.subr.bf16.mxu0 %v1099
    %1773 = vmatpush1.bf16.msra.mxu0 %v1098
    %1774 = vmatprep.mubr.bf16.mxu0 %v141
    %1775 = vmatmul.mubr.bf16.gmra.mrb[0].mxu0 %v140
    %v1776 = vpop.f32.mrb[0].mxu0
    %v1777 = vadd.f32 %v1704, %v1776
    %v1778 = vpop.f32.mrb[0].mxu0
    %v1779 = vadd.f32 %v1706, %v1778
    %v1780 = vpop.f32.mrb[0].mxu0
    %v1781 = vadd.f32 %v1708, %v1780
    %v1782 = vpop.f32.mrb[0].mxu0
    %v1783 = vadd.f32 %v1710, %v1782
    %1784 = vmatprep.mubr.bf16.mxu0 %v148
    %1785 = vmatmul.mubr.bf16.gmra.mrb[0].mxu0 %v147
    %v1786 = vpop.f32.mrb[0].mxu0
    %v1787 = vadd.f32 %v1714, %v1786
    %v1788 = vpop.f32.mrb[0].mxu0
    %v1789 = vadd.f32 %v1716, %v1788
    %v1790 = vpop.f32.mrb[0].mxu0
    %v1791 = vadd.f32 %v1718, %v1790
    %v1792 = vpop.f32.mrb[0].mxu0
    %v1793 = vadd.f32 %v1720, %v1792
    %1794 = vmatprep.mubr.bf16.mxu0 %v155
    %1795 = vmatmul.mubr.bf16.gmra.mrb[0].mxu0 %v154
    %v1796 = vpop.f32.mrb[0].mxu0
    %v1797 = vadd.f32 %v1724, %v1796
    %v1798 = vpop.f32.mrb[0].mxu0
    %v1799 = vadd.f32 %v1726, %v1798
    %v1800 = vpop.f32.mrb[0].mxu0
    %v1801 = vadd.f32 %v1728, %v1800
    %v1802 = vpop.f32.mrb[0].mxu0
    %v1803 = vadd.f32 %v1730, %v1802
    %1804 = vmatprep.mubr.bf16.mxu0 %v162
    %1805 = vmatmul.mubr.bf16.gmra.mrb[0].mxu0 %v161
    %v1806 = vpop.f32.mrb[0].mxu0
    %v1807 = vadd.f32 %v1734, %v1806
    %v1808 = vpop.f32.mrb[0].mxu0
    %v1809 = vadd.f32 %v1736, %v1808
    %v1810 = vpop.f32.mrb[0].mxu0
    %v1811 = vadd.f32 %v1738, %v1810
    %v1812 = vpop.f32.mrb[0].mxu0
    %v1813 = vadd.f32 %v1740, %v1812
    %1814 = vdwg.mxu0
    %1815 = vmatprep.subr.bf16.mxu0 %v1103
    %1816 = vmatpush1.bf16.msra.mxu0 %v1102
    %1817 = vmatprep.subr.bf16.mxu0 %v1107
    %1818 = vmatpush1.bf16.msra.mxu0 %v1106
    %1819 = vmatprep.subr.bf16.mxu0 %v1111
    %1820 = vmatpush1.bf16.msra.mxu0 %v1110
    %1821 = vmatprep.subr.bf16.mxu0 %v1115
    %1822 = vmatpush1.bf16.msra.mxu0 %v1114
    %1823 = vmatprep.subr.bf16.mxu0 %v1119
    %1824 = vmatpush1.bf16.msra.mxu0 %v1118
    %1825 = vmatprep.subr.bf16.mxu0 %v1123
    %1826 = vmatpush1.bf16.msra.mxu0 %v1122
    %1827 = vmatprep.subr.bf16.mxu0 %v1127
    %1828 = vmatpush1.bf16.msra.mxu0 %v1126
    %1829 = vmatprep.subr.bf16.mxu0 %v1131
    %1830 = vmatpush1.bf16.msra.mxu0 %v1130
    %1831 = vmatprep.subr.bf16.mxu0 %v1135
    %1832 = vmatpush1.bf16.msra.mxu0 %v1134
    %1833 = vmatprep.subr.bf16.mxu0 %v1139
    %1834 = vmatpush1.bf16.msra.mxu0 %v1138
    %1835 = vmatprep.subr.bf16.mxu0 %v1143
    %1836 = vmatpush1.bf16.msra.mxu0 %v1142
    %1837 = vmatprep.subr.bf16.mxu0 %v1147
    %1838 = vmatpush1.bf16.msra.mxu0 %v1146
    %1839 = vmatprep.subr.bf16.mxu0 %v1151
    %1840 = vmatpush1.bf16.msra.mxu0 %v1150
    %1841 = vmatprep.subr.bf16.mxu0 %v1155
    %1842 = vmatpush1.bf16.msra.mxu0 %v1154
    %1843 = vmatprep.subr.bf16.mxu0 %v1159
    %1844 = vmatpush1.bf16.msra.mxu0 %v1158
    %1845 = vmatprep.subr.bf16.mxu0 %v1163
    %1846 = vmatpush1.bf16.msra.mxu0 %v1162
    %1847 = vmatprep.mubr.bf16.mxu0 %v143
    %1848 = vmatmul.mubr.bf16.gmra.mrb[0].mxu0 %v142
    %v1849 = vpop.f32.mrb[0].mxu0
    %v1850 = vadd.f32 %v1777, %v1849
    %v1851 = vpop.f32.mrb[0].mxu0
    %v1852 = vadd.f32 %v1779, %v1851
    %v1853 = vpop.f32.mrb[0].mxu0
    %v1854 = vadd.f32 %v1781, %v1853
    %v1855 = vpop.f32.mrb[0].mxu0
    %v1856 = vadd.f32 %v1783, %v1855
    %1857 = vmatprep.mubr.bf16.mxu0 %v150
    %1858 = vmatmul.mubr.bf16.gmra.mrb[0].mxu0 %v149
    %v1859 = vpop.f32.mrb[0].mxu0
    %v1860 = vadd.f32 %v1787, %v1859
    %v1861 = vpop.f32.mrb[0].mxu0
    %v1862 = vadd.f32 %v1789, %v1861
    %v1863 = vpop.f32.mrb[0].mxu0
    %v1864 = vadd.f32 %v1791, %v1863
    %v1865 = vpop.f32.mrb[0].mxu0
    %v1866 = vadd.f32 %v1793, %v1865
    %1867 = vmatprep.mubr.bf16.mxu0 %v157
    %1868 = vmatmul.mubr.bf16.gmra.mrb[0].mxu0 %v156
    %v1869 = vpop.f32.mrb[0].mxu0
    %v1870 = vadd.f32 %v1797, %v1869
    %v1871 = vpop.f32.mrb[0].mxu0
    %v1872 = vadd.f32 %v1799, %v1871
    %v1873 = vpop.f32.mrb[0].mxu0
    %v1874 = vadd.f32 %v1801, %v1873
    %v1875 = vpop.f32.mrb[0].mxu0
    %v1876 = vadd.f32 %v1803, %v1875
    %1877 = vmatprep.mubr.bf16.mxu0 %v164
    %1878 = vmatmul.mubr.bf16.gmra.mrb[0].mxu0 %v163
    %v1879 = vpop.f32.mrb[0].mxu0
    %v1880 = vadd.f32 %v1807, %v1879
    %v1881 = vpop.f32.mrb[0].mxu0
    %v1882 = vadd.f32 %v1809, %v1881
    %v1883 = vpop.f32.mrb[0].mxu0
    %v1884 = vadd.f32 %v1811, %v1883
    %v1885 = vpop.f32.mrb[0].mxu0
    %v1886 = vadd.f32 %v1813, %v1885
    %1887 = vdwg.mxu0
    %1888 = vmatprep.subr.bf16.mxu0 %v1167
    %1889 = vmatpush1.bf16.msra.mxu0 %v1166
    %1890 = vmatprep.subr.bf16.mxu0 0
    %1891 = vmatpush1.bf16.msra.mxu0 0
    %1892 = vmatprep.subr.bf16.mxu0 0
    %1893 = vmatpush1.bf16.msra.mxu0 0
    %1894 = vmatprep.subr.bf16.mxu0 0
    %1895 = vmatpush1.bf16.msra.mxu0 0
    %1896 = vmatprep.subr.bf16.mxu0 0
    %1897 = vmatpush1.bf16.msra.mxu0 0
    %1898 = vmatprep.subr.bf16.mxu0 0
    %1899 = vmatpush1.bf16.msra.mxu0 0
    %1900 = vmatprep.subr.bf16.mxu0 0
    %1901 = vmatpush1.bf16.msra.mxu0 0
    %1902 = vmatprep.subr.bf16.mxu0 0
    %1903 = vmatpush1.bf16.msra.mxu0 0
    %1904 = vmatprep.subr.bf16.mxu0 0
    %1905 = vmatpush1.bf16.msra.mxu0 0
    %1906 = vmatprep.subr.bf16.mxu0 0
    %1907 = vmatpush1.bf16.msra.mxu0 0
    %1908 = vmatprep.subr.bf16.mxu0 0
    %1909 = vmatpush1.bf16.msra.mxu0 0
    %1910 = vmatprep.subr.bf16.mxu0 0
    %1911 = vmatpush1.bf16.msra.mxu0 0
    %1912 = vmatprep.subr.bf16.mxu0 0
    %1913 = vmatpush1.bf16.msra.mxu0 0
    %1914 = vmatprep.subr.bf16.mxu0 0
    %1915 = vmatpush1.bf16.msra.mxu0 0
    %1916 = vmatprep.subr.bf16.mxu0 0
    %1917 = vmatpush1.bf16.msra.mxu0 0
    %1918 = vmatprep.subr.bf16.mxu0 0
    %1919 = vmatpush1.bf16.msra.mxu0 0
    %1920 = vmatprep.mubr.bf16.mxu0 0
    %1921 = vmatmul.mubr.bf16.gmra.mrb[0].mxu0 %v1366
    %v1922 = vpop.f32.mrb[0].mxu0
    %v1923 = vadd.f32 %v1850, %v1922
    %v1924 = vpop.f32.mrb[0].mxu0
    %v1925 = vadd.f32 %v1852, %v1924
    %v1926 = vpop.f32.mrb[0].mxu0
    %v1927 = vadd.f32 %v1854, %v1926
    %v1928 = vpop.f32.mrb[0].mxu0
    %v1929 = vadd.f32 %v1856, %v1928
    %1930 = vmatprep.mubr.bf16.mxu0 0
    %1931 = vmatmul.mubr.bf16.gmra.mrb[0].mxu0 %v1369
    %v1932 = vpop.f32.mrb[0].mxu0
    %v1933 = vadd.f32 %v1860, %v1932
    %v1934 = vpop.f32.mrb[0].mxu0
    %v1935 = vadd.f32 %v1862, %v1934
    %v1936 = vpop.f32.mrb[0].mxu0
    %v1937 = vadd.f32 %v1864, %v1936
    %v1938 = vpop.f32.mrb[0].mxu0
    %v1939 = vadd.f32 %v1866, %v1938
    %1940 = vmatprep.mubr.bf16.mxu0 0
    %1941 = vmatmul.mubr.bf16.gmra.mrb[0].mxu0 %v1372
    %v1942 = vpop.f32.mrb[0].mxu0
    %v1943 = vadd.f32 %v1870, %v1942
    %v1944 = vpop.f32.mrb[0].mxu0
    %v1945 = vadd.f32 %v1872, %v1944
    %v1946 = vpop.f32.mrb[0].mxu0
    %v1947 = vadd.f32 %v1874, %v1946
    %v1948 = vpop.f32.mrb[0].mxu0
    %v1949 = vadd.f32 %v1876, %v1948
    %1950 = vmatprep.mubr.bf16.mxu0 0
    %1951 = vmatmul.mubr.bf16.gmra.mrb[0].mxu0 %v1375
    %v1952 = vpop.f32.mrb[0].mxu0
    %v1953 = vadd.f32 %v1880, %v1952
    %v1954 = vpop.f32.mrb[0].mxu0
    %v1955 = vadd.f32 %v1882, %v1954
    %v1956 = vpop.f32.mrb[0].mxu0
    %v1957 = vadd.f32 %v1884, %v1956
    %v1958 = vpop.f32.mrb[0].mxu0
    %v1959 = vadd.f32 %v1886, %v1958
    %1960 = vdwg.mxu0
    %v1961 = vmax.f32 %v1631, 0.0
    %v1962 = vmax.f32 %v1633, 0.0
    %v1963 = vmax.f32 %v1923, 0.0
    %v1964 = vmax.f32 %v1925, 0.0
    %v1965 = vmax.f32 %v1635, 0.0
    %v1966 = vmax.f32 %v1637, 0.0
    %v1967 = vmax.f32 %v1927, 0.0
    %v1968 = vmax.f32 %v1929, 0.0
    %v1969 = vmax.f32 %v1641, 0.0
    %v1970 = vmax.f32 %v1643, 0.0
    %v1971 = vmax.f32 %v1933, 0.0
    %v1972 = vmax.f32 %v1935, 0.0
    %v1973 = vmax.f32 %v1645, 0.0
    %v1974 = vmax.f32 %v1647, 0.0
    %v1975 = vmax.f32 %v1937, 0.0
    %v1976 = vmax.f32 %v1939, 0.0
    %v1977 = vmax.f32 %v1651, 0.0
    %v1978 = vmax.f32 %v1653, 0.0
    %v1979 = vmax.f32 %v1943, 0.0
    %v1980 = vmax.f32 %v1945, 0.0
    %v1981 = vmax.f32 %v1655, 0.0
    %v1982 = vmax.f32 %v1657, 0.0
    %v1983 = vmax.f32 %v1947, 0.0
    %v1984 = vmax.f32 %v1949, 0.0
    %v1985 = vmax.f32 %v1661, 0.0
    %v1986 = vmax.f32 %v1663, 0.0
    %v1987 = vmax.f32 %v1953, 0.0
    %v1988 = vmax.f32 %v1955, 0.0
    %v1989 = vmax.f32 %v1665, 0.0
    %v1990 = vmax.f32 %v1667, 0.0
    %v1991 = vmax.f32 %v1957, 0.0
    %v1992 = vmax.f32 %v1959, 0.0
    %v1993 = vpack.c.bf16 %v1965, %v1961
    %v1994 = vpack.c.bf16 %v1966, %v1962
    %v1995 = vpack.c.bf16 %v1967, %v1963
    %v1996 = vpack.c.bf16 %v1968, %v1964
    %v1997 = vpack.c.bf16 %v1973, %v1969
    %v1998 = vpack.c.bf16 %v1974, %v1970
    %v1999 = vpack.c.bf16 %v1975, %v1971
    %v2000 = vpack.c.bf16 %v1976, %v1972
    %v2001 = vpack.c.bf16 %v1981, %v1977
    %v2002 = vpack.c.bf16 %v1982, %v1978
    %v2003 = vpack.c.bf16 %v1983, %v1979
    %v2004 = vpack.c.bf16 %v1984, %v1980
    %v2005 = vpack.c.bf16 %v1989, %v1985
    %v2006 = vpack.c.bf16 %v1990, %v1986
    %v2007 = vpack.c.bf16 %v1991, %v1987
    %v2008 = vpack.c.bf16 %v1992, %v1988
    %v2009 = vld [vmem:[#allocation6] sm:$0xff]
    %v2010 = vld [vmem:[#allocation6 + $0x8] sm:$0xff]
    %v2011 = vld [vmem:[#allocation6 + $0x10] sm:$0xff]
    %v2012 = vld [vmem:[#allocation6 + $0x18] sm:$0xff]
    %v2013 = vld [vmem:[#allocation6 + $0x20] sm:$0xff]
    %v2014 = vld [vmem:[#allocation6 + $0x28] sm:$0xff]
    %v2015 = vld [vmem:[#allocation6 + $0x30] sm:$0xff]
    %v2016 = vld [vmem:[#allocation6 + $0x38] sm:$0xff]
    %v2017 = vld [vmem:[#allocation6 + $0x40] sm:$0xff]
    %v2018 = vld [vmem:[#allocation6 + $0x48] sm:$0xff]
    %v2019 = vld [vmem:[#allocation6 + $0x50] sm:$0xff]
    %v2020 = vld [vmem:[#allocation6 + $0x58] sm:$0xff]
    %v2021 = vld [vmem:[#allocation6 + $0x60] sm:$0xff]
    %v2022 = vld [vmem:[#allocation6 + $0x68] sm:$0xff]
    %v2023 = vld [vmem:[#allocation6 + $0x70] sm:$0xff]
    %v2024 = vld [vmem:[#allocation6 + $0x78] sm:$0xff]
    %v2025 = vld [vmem:[#allocation6 + $0x80] sm:$0xff]
    %v2026 = vld [vmem:[#allocation6 + $0x88] sm:$0xff]
    %v2027 = vld [vmem:[#allocation6 + $0x90] sm:$0xff]
    %v2028 = vld [vmem:[#allocation6 + $0x98] sm:$0xff]
    %v2029 = vld [vmem:[#allocation6 + $0xa0] sm:$0xff]
    %v2030 = vld [vmem:[#allocation6 + $0xa8] sm:$0xff]
    %v2031 = vld [vmem:[#allocation6 + $0xb0] sm:$0xff]
    %v2032 = vld [vmem:[#allocation6 + $0xb8] sm:$0xff]
    %v2033 = vld [vmem:[#allocation6 + $0xc0] sm:$0xff]
    %v2034 = vld [vmem:[#allocation6 + $0xc8] sm:$0xff]
    %v2035 = vld [vmem:[#allocation6 + $0xd0] sm:$0xff]
    %v2036 = vld [vmem:[#allocation6 + $0xd8] sm:$0xff]
    %v2037 = vld [vmem:[#allocation6 + $0xe0] sm:$0xff]
    %v2038 = vld [vmem:[#allocation6 + $0xe8] sm:$0xff]
    %v2039 = vld [vmem:[#allocation6 + $0xf0] sm:$0xff]
    %v2040 = vld [vmem:[#allocation6 + $0xf8] sm:$0xff]
    %v2041 = vld [vmem:[#allocation6 + $0x100] sm:$0xff]
    %v2042 = vld [vmem:[#allocation6 + $0x108] sm:$0xff]
    %v2043 = vld [vmem:[#allocation6 + $0x110] sm:$0xff]
    %v2044 = vld [vmem:[#allocation6 + $0x118] sm:$0xff]
    %v2045 = vld [vmem:[#allocation6 + $0x120] sm:$0xff]
    %v2046 = vld [vmem:[#allocation6 + $0x128] sm:$0xff]
    %v2047 = vld [vmem:[#allocation6 + $0x130] sm:$0xff]
    %v2048 = vld [vmem:[#allocation6 + $0x138] sm:$0xff]
    %v2049 = vld [vmem:[#allocation6 + $0x140] sm:$0xff]
    %v2050 = vld [vmem:[#allocation6 + $0x148] sm:$0xff]
    %v2051 = vld [vmem:[#allocation6 + $0x150] sm:$0xff]
    %v2052 = vld [vmem:[#allocation6 + $0x158] sm:$0xff]
    %v2053 = vld [vmem:[#allocation6 + $0x160] sm:$0xff]
    %v2054 = vld [vmem:[#allocation6 + $0x168] sm:$0xff]
    %v2055 = vld [vmem:[#allocation6 + $0x170] sm:$0xff]
    %v2056 = vld [vmem:[#allocation6 + $0x178] sm:$0xff]
    %v2057 = vld [vmem:[#allocation6 + $0x180] sm:$0xff]
    %v2058 = vld [vmem:[#allocation6 + $0x188] sm:$0xff]
    %v2059 = vld [vmem:[#allocation6 + $0x190] sm:$0xff]
    %v2060 = vld [vmem:[#allocation6 + $0x198] sm:$0xff]
    %v2061 = vld [vmem:[#allocation6 + $0x1a0] sm:$0xff]
    %v2062 = vld [vmem:[#allocation6 + $0x1a8] sm:$0xff]
    %v2063 = vld [vmem:[#allocation6 + $0x1b0] sm:$0xff]
    %v2064 = vld [vmem:[#allocation6 + $0x1b8] sm:$0xff]
    %v2065 = vld [vmem:[#allocation6 + $0x1c0] sm:$0xff]
    %v2066 = vld [vmem:[#allocation6 + $0x1c8] sm:$0xff]
    %v2067 = vld [vmem:[#allocation6 + $0x1d0] sm:$0xff]
    %v2068 = vld [vmem:[#allocation6 + $0x1d8] sm:$0xff]
    %v2069 = vld [vmem:[#allocation6 + $0x1e0] sm:$0xff]
    %v2070 = vld [vmem:[#allocation6 + $0x1e8] sm:$0xff]
    %v2071 = vld [vmem:[#allocation6 + $0x1f0] sm:$0xff]
    %v2072 = vld [vmem:[#allocation6 + $0x1f8] sm:$0xff]
    %v2073 = vld [vmem:[#allocation6 + $0x200] sm:$0xff]
    %v2074 = vld [vmem:[#allocation6 + $0x208] sm:$0xff]
    %v2075 = vld [vmem:[#allocation6 + $0x210] sm:$0xff]
    %v2076 = vld [vmem:[#allocation6 + $0x218] sm:$0xff]
    %v2077 = vld [vmem:[#allocation6 + $0x220] sm:$0xff]
    %v2078 = vld [vmem:[#allocation6 + $0x228] sm:$0xff]
    %v2079 = vld [vmem:[#allocation6 + $0x230] sm:$0xff]
    %v2080 = vld [vmem:[#allocation6 + $0x238] sm:$0xff]
    %v2081 = vld [vmem:[#allocation6 + $0x240] sm:$0xff]
    %v2082 = vld [vmem:[#allocation6 + $0x248] sm:$0xff]
    %v2083 = vld [vmem:[#allocation6 + $0x250] sm:$0xff]
    %v2084 = vld [vmem:[#allocation6 + $0x258] sm:$0xff]
    %v2085 = vld [vmem:[#allocation6 + $0x260] sm:$0xff]
    %v2086 = vld [vmem:[#allocation6 + $0x268] sm:$0xff]
    %v2087 = vld [vmem:[#allocation6 + $0x270] sm:$0xff]
    %v2088 = vld [vmem:[#allocation6 + $0x278] sm:$0xff]
    %v2089 = vld [vmem:[#allocation6 + $0x280] sm:$0xff]
    %v2090 = vld [vmem:[#allocation6 + $0x288] sm:$0xff]
    %v2091 = vld [vmem:[#allocation6 + $0x290] sm:$0xff]
    %v2092 = vld [vmem:[#allocation6 + $0x298] sm:$0xff]
    %v2093 = vld [vmem:[#allocation6 + $0x2a0] sm:$0xff]
    %v2094 = vld [vmem:[#allocation6 + $0x2a8] sm:$0xff]
    %v2095 = vld [vmem:[#allocation6 + $0x2b0] sm:$0xff]
    %v2096 = vld [vmem:[#allocation6 + $0x2b8] sm:$0xff]
    %v2097 = vld [vmem:[#allocation6 + $0x2c0] sm:$0xff]
    %v2098 = vld [vmem:[#allocation6 + $0x2c8] sm:$0xff]
    %v2099 = vld [vmem:[#allocation6 + $0x2d0] sm:$0xff]
    %v2100 = vld [vmem:[#allocation6 + $0x2d8] sm:$0xff]
    %v2101 = vld [vmem:[#allocation6 + $0x2e0] sm:$0xff]
    %v2102 = vld [vmem:[#allocation6 + $0x2e8] sm:$0xff]
    %v2103 = vld [vmem:[#allocation6 + $0x2f0] sm:$0xff]
    %v2104 = vld [vmem:[#allocation6 + $0x2f8] sm:$0xff]
    %v2105 = vld [vmem:[#allocation6 + $0x300] sm:$0xff]
    %v2106 = vld [vmem:[#allocation6 + $0x308] sm:$0xff]
    %v2107 = vld [vmem:[#allocation6 + $0x310] sm:$0xff]
    %v2108 = vld [vmem:[#allocation6 + $0x318] sm:$0xff]
    %v2109 = vld [vmem:[#allocation6 + $0x320] sm:$0xff]
    %v2110 = vld [vmem:[#allocation6 + $0x328] sm:$0xff]
    %v2111 = vld [vmem:[#allocation6 + $0x330] sm:$0xff]
    %v2112 = vld [vmem:[#allocation6 + $0x338] sm:$0xff]
    %v2113 = vld [vmem:[#allocation6 + $0x340] sm:$0xff]
    %v2114 = vld [vmem:[#allocation6 + $0x348] sm:$0xff]
    %v2115 = vld [vmem:[#allocation6 + $0x350] sm:$0xff]
    %v2116 = vld [vmem:[#allocation6 + $0x358] sm:$0xff]
    %v2117 = vld [vmem:[#allocation6 + $0x360] sm:$0xff]
    %v2118 = vld [vmem:[#allocation6 + $0x368] sm:$0xff]
    %v2119 = vld [vmem:[#allocation6 + $0x370] sm:$0xff]
    %v2120 = vld [vmem:[#allocation6 + $0x378] sm:$0xff]
    %v2121 = vld [vmem:[#allocation6 + $0x380] sm:$0xff]
    %v2122 = vld [vmem:[#allocation6 + $0x388] sm:$0xff]
    %v2123 = vld [vmem:[#allocation6 + $0x390] sm:$0xff]
    %v2124 = vld [vmem:[#allocation6 + $0x398] sm:$0xff]
    %v2125 = vld [vmem:[#allocation6 + $0x3a0] sm:$0xff]
    %v2126 = vld [vmem:[#allocation6 + $0x3a8] sm:$0xff]
    %v2127 = vld [vmem:[#allocation6 + $0x3b0] sm:$0xff]
    %v2128 = vld [vmem:[#allocation6 + $0x3b8] sm:$0xff]
    %v2129 = vld [vmem:[#allocation6 + $0x3c0] sm:$0xff]
    %v2130 = vld [vmem:[#allocation6 + $0x3c8] sm:$0xff]
    %v2131 = vld [vmem:[#allocation6 + $0x3d0] sm:$0xff]
    %v2132 = vld [vmem:[#allocation6 + $0x3d8] sm:$0xff]
    %v2133 = vld [vmem:[#allocation6 + $0x3e0] sm:$0xff]
    %v2134 = vld [vmem:[#allocation6 + $0x3e8] sm:$0xff]
    %v2135 = vld [vmem:[#allocation6 + $0x3f0] sm:$0xff]
    %v2136 = vld [vmem:[#allocation6 + $0x3f8] sm:$0xff]
    %v2137 = vld [vmem:[%s4] sm:$0xf]
    %v2139 = vlaneseq
    %v2140 = vshrl.u32 %v2139, 7
    %v2141 = vsub.s32 0, %v2140
    %v2142 = vrot.slane %v2137, %v2141
    %v2143 = vlaneseq
    %v2144 = vshrl.u32 %v2143, 7
    %v2145 = vsub.s32 1, %v2144
    %v2146 = vrot.slane %v2137, %v2145
    %v2147 = vlaneseq
    %v2148 = vshrl.u32 %v2147, 7
    %v2149 = vsub.s32 2, %v2148
    %v2150 = vrot.slane %v2137, %v2149
    %v2151 = vlaneseq
    %v2152 = vshrl.u32 %v2151, 7
    %v2153 = vsub.s32 3, %v2152
    %v2154 = vrot.slane %v2137, %v2153
    %v2287 = vunpack.c.l.b16 %v2009
    %v2288 = vunpack.c.h.b16 %v2009
    %v2289 = vunpack.c.l.b16 %v2010
    %v2290 = vunpack.c.h.b16 %v2010
    %v2291 = vunpack.c.l.b16 %v2011
    %v2292 = vunpack.c.h.b16 %v2011
    %v2293 = vunpack.c.l.b16 %v2012
    %v2294 = vunpack.c.h.b16 %v2012
    %v2295 = vunpack.c.l.b16 %v2013
    %v2296 = vunpack.c.h.b16 %v2013
    %v2297 = vunpack.c.l.b16 %v2014
    %v2298 = vunpack.c.h.b16 %v2014
    %v2299 = vunpack.c.l.b16 %v2015
    %v2300 = vunpack.c.h.b16 %v2015
    %v2301 = vunpack.c.l.b16 %v2016
    %v2302 = vunpack.c.h.b16 %v2016
    %v2303 = vunpack.c.l.b16 %v2017
    %v2304 = vunpack.c.h.b16 %v2017
    %v2305 = vunpack.c.l.b16 %v2018
    %v2306 = vunpack.c.h.b16 %v2018
    %v2307 = vunpack.c.l.b16 %v2019
    %v2308 = vunpack.c.h.b16 %v2019
    %v2309 = vunpack.c.l.b16 %v2020
    %v2310 = vunpack.c.h.b16 %v2020
    %v2311 = vunpack.c.l.b16 %v2021
    %v2312 = vunpack.c.h.b16 %v2021
    %v2313 = vunpack.c.l.b16 %v2022
    %v2314 = vunpack.c.h.b16 %v2022
    %v2315 = vunpack.c.l.b16 %v2023
    %v2316 = vunpack.c.h.b16 %v2023
    %v2317 = vunpack.c.l.b16 %v2024
    %v2318 = vunpack.c.h.b16 %v2024
    %v2319 = vunpack.c.l.b16 %v2025
    %v2320 = vunpack.c.h.b16 %v2025
    %v2321 = vunpack.c.l.b16 %v2026
    %v2322 = vunpack.c.h.b16 %v2026
    %v2323 = vunpack.c.l.b16 %v2027
    %v2324 = vunpack.c.h.b16 %v2027
    %v2325 = vunpack.c.l.b16 %v2028
    %v2326 = vunpack.c.h.b16 %v2028
    %v2327 = vunpack.c.l.b16 %v2029
    %v2328 = vunpack.c.h.b16 %v2029
    %v2329 = vunpack.c.l.b16 %v2030
    %v2330 = vunpack.c.h.b16 %v2030
    %v2331 = vunpack.c.l.b16 %v2031
    %v2332 = vunpack.c.h.b16 %v2031
    %v2333 = vunpack.c.l.b16 %v2032
    %v2334 = vunpack.c.h.b16 %v2032
    %v2335 = vunpack.c.l.b16 %v2033
    %v2336 = vunpack.c.h.b16 %v2033
    %v2337 = vunpack.c.l.b16 %v2034
    %v2338 = vunpack.c.h.b16 %v2034
    %v2339 = vunpack.c.l.b16 %v2035
    %v2340 = vunpack.c.h.b16 %v2035
    %v2341 = vunpack.c.l.b16 %v2036
    %v2342 = vunpack.c.h.b16 %v2036
    %v2343 = vunpack.c.l.b16 %v2037
    %v2344 = vunpack.c.h.b16 %v2037
    %v2345 = vunpack.c.l.b16 %v2038
    %v2346 = vunpack.c.h.b16 %v2038
    %v2347 = vunpack.c.l.b16 %v2039
    %v2348 = vunpack.c.h.b16 %v2039
    %v2349 = vunpack.c.l.b16 %v2040
    %v2350 = vunpack.c.h.b16 %v2040
    %v2351 = vunpack.c.l.b16 %v2041
    %v2352 = vunpack.c.h.b16 %v2041
    %v2353 = vunpack.c.l.b16 %v2042
    %v2354 = vunpack.c.h.b16 %v2042
    %v2355 = vunpack.c.l.b16 %v2043
    %v2356 = vunpack.c.h.b16 %v2043
    %v2357 = vunpack.c.l.b16 %v2044
    %v2358 = vunpack.c.h.b16 %v2044
    %v2359 = vunpack.c.l.b16 %v2045
    %v2360 = vunpack.c.h.b16 %v2045
    %v2361 = vunpack.c.l.b16 %v2046
    %v2362 = vunpack.c.h.b16 %v2046
    %v2363 = vunpack.c.l.b16 %v2047
    %v2364 = vunpack.c.h.b16 %v2047
    %v2365 = vunpack.c.l.b16 %v2048
    %v2366 = vunpack.c.h.b16 %v2048
    %v2367 = vunpack.c.l.b16 %v2049
    %v2368 = vunpack.c.h.b16 %v2049
    %v2369 = vunpack.c.l.b16 %v2050
    %v2370 = vunpack.c.h.b16 %v2050
    %v2371 = vunpack.c.l.b16 %v2051
    %v2372 = vunpack.c.h.b16 %v2051
    %v2373 = vunpack.c.l.b16 %v2052
    %v2374 = vunpack.c.h.b16 %v2052
    %v2375 = vunpack.c.l.b16 %v2053
    %v2376 = vunpack.c.h.b16 %v2053
    %v2377 = vunpack.c.l.b16 %v2054
    %v2378 = vunpack.c.h.b16 %v2054
    %v2379 = vunpack.c.l.b16 %v2055
    %v2380 = vunpack.c.h.b16 %v2055
    %v2381 = vunpack.c.l.b16 %v2056
    %v2382 = vunpack.c.h.b16 %v2056
    %v2383 = vunpack.c.l.b16 %v2057
    %v2384 = vunpack.c.h.b16 %v2057
    %v2385 = vunpack.c.l.b16 %v2058
    %v2386 = vunpack.c.h.b16 %v2058
    %v2387 = vunpack.c.l.b16 %v2059
    %v2388 = vunpack.c.h.b16 %v2059
    %v2389 = vunpack.c.l.b16 %v2060
    %v2390 = vunpack.c.h.b16 %v2060
    %v2391 = vunpack.c.l.b16 %v2061
    %v2392 = vunpack.c.h.b16 %v2061
    %v2393 = vunpack.c.l.b16 %v2062
    %v2394 = vunpack.c.h.b16 %v2062
    %v2395 = vunpack.c.l.b16 %v2063
    %v2396 = vunpack.c.h.b16 %v2063
    %v2397 = vunpack.c.l.b16 %v2064
    %v2398 = vunpack.c.h.b16 %v2064
    %v2399 = vunpack.c.l.b16 %v2065
    %v2400 = vunpack.c.h.b16 %v2065
    %v2401 = vunpack.c.l.b16 %v2066
    %v2402 = vunpack.c.h.b16 %v2066
    %v2403 = vunpack.c.l.b16 %v2067
    %v2404 = vunpack.c.h.b16 %v2067
    %v2405 = vunpack.c.l.b16 %v2068
    %v2406 = vunpack.c.h.b16 %v2068
    %v2407 = vunpack.c.l.b16 %v2069
    %v2408 = vunpack.c.h.b16 %v2069
    %v2409 = vunpack.c.l.b16 %v2070
    %v2410 = vunpack.c.h.b16 %v2070
    %v2411 = vunpack.c.l.b16 %v2071
    %v2412 = vunpack.c.h.b16 %v2071
    %v2413 = vunpack.c.l.b16 %v2072
    %v2414 = vunpack.c.h.b16 %v2072
    %v2415 = vunpack.c.l.b16 %v2073
    %v2416 = vunpack.c.h.b16 %v2073
    %v2417 = vunpack.c.l.b16 %v2074
    %v2418 = vunpack.c.h.b16 %v2074
    %v2419 = vunpack.c.l.b16 %v2075
    %v2420 = vunpack.c.h.b16 %v2075
    %v2421 = vunpack.c.l.b16 %v2076
    %v2422 = vunpack.c.h.b16 %v2076
    %v2423 = vunpack.c.l.b16 %v2077
    %v2424 = vunpack.c.h.b16 %v2077
    %v2425 = vunpack.c.l.b16 %v2078
    %v2426 = vunpack.c.h.b16 %v2078
    %v2427 = vunpack.c.l.b16 %v2079
    %v2428 = vunpack.c.h.b16 %v2079
    %v2429 = vunpack.c.l.b16 %v2080
    %v2430 = vunpack.c.h.b16 %v2080
    %v2431 = vunpack.c.l.b16 %v2081
    %v2432 = vunpack.c.h.b16 %v2081
    %v2433 = vunpack.c.l.b16 %v2082
    %v2434 = vunpack.c.h.b16 %v2082
    %v2435 = vunpack.c.l.b16 %v2083
    %v2436 = vunpack.c.h.b16 %v2083
    %v2437 = vunpack.c.l.b16 %v2084
    %v2438 = vunpack.c.h.b16 %v2084
    %v2439 = vunpack.c.l.b16 %v2085
    %v2440 = vunpack.c.h.b16 %v2085
    %v2441 = vunpack.c.l.b16 %v2086
    %v2442 = vunpack.c.h.b16 %v2086
    %v2443 = vunpack.c.l.b16 %v2087
    %v2444 = vunpack.c.h.b16 %v2087
    %v2445 = vunpack.c.l.b16 %v2088
    %v2446 = vunpack.c.h.b16 %v2088
    %v2447 = vunpack.c.l.b16 %v2089
    %v2448 = vunpack.c.h.b16 %v2089
    %v2449 = vunpack.c.l.b16 %v2090
    %v2450 = vunpack.c.h.b16 %v2090
    %v2451 = vunpack.c.l.b16 %v2091
    %v2452 = vunpack.c.h.b16 %v2091
    %v2453 = vunpack.c.l.b16 %v2092
    %v2454 = vunpack.c.h.b16 %v2092
    %v2455 = vunpack.c.l.b16 %v2093
    %v2456 = vunpack.c.h.b16 %v2093
    %v2457 = vunpack.c.l.b16 %v2094
    %v2458 = vunpack.c.h.b16 %v2094
    %v2459 = vunpack.c.l.b16 %v2095
    %v2460 = vunpack.c.h.b16 %v2095
    %v2461 = vunpack.c.l.b16 %v2096
    %v2462 = vunpack.c.h.b16 %v2096
    %v2463 = vunpack.c.l.b16 %v2097
    %v2464 = vunpack.c.h.b16 %v2097
    %v2465 = vunpack.c.l.b16 %v2098
    %v2466 = vunpack.c.h.b16 %v2098
    %v2467 = vunpack.c.l.b16 %v2099
    %v2468 = vunpack.c.h.b16 %v2099
    %v2469 = vunpack.c.l.b16 %v2100
    %v2470 = vunpack.c.h.b16 %v2100
    %v2471 = vunpack.c.l.b16 %v2101
    %v2472 = vunpack.c.h.b16 %v2101
    %v2473 = vunpack.c.l.b16 %v2102
    %v2474 = vunpack.c.h.b16 %v2102
    %v2475 = vunpack.c.l.b16 %v2103
    %v2476 = vunpack.c.h.b16 %v2103
    %v2477 = vunpack.c.l.b16 %v2104
    %v2478 = vunpack.c.h.b16 %v2104
    %v2479 = vunpack.c.l.b16 %v2105
    %v2480 = vunpack.c.h.b16 %v2105
    %v2481 = vunpack.c.l.b16 %v2106
    %v2482 = vunpack.c.h.b16 %v2106
    %v2483 = vunpack.c.l.b16 %v2107
    %v2484 = vunpack.c.h.b16 %v2107
    %v2485 = vunpack.c.l.b16 %v2108
    %v2486 = vunpack.c.h.b16 %v2108
    %v2487 = vunpack.c.l.b16 %v2109
    %v2488 = vunpack.c.h.b16 %v2109
    %v2489 = vunpack.c.l.b16 %v2110
    %v2490 = vunpack.c.h.b16 %v2110
    %v2491 = vunpack.c.l.b16 %v2111
    %v2492 = vunpack.c.h.b16 %v2111
    %v2493 = vunpack.c.l.b16 %v2112
    %v2494 = vunpack.c.h.b16 %v2112
    %v2495 = vunpack.c.l.b16 %v2113
    %v2496 = vunpack.c.h.b16 %v2113
    %v2497 = vunpack.c.l.b16 %v2114
    %v2498 = vunpack.c.h.b16 %v2114
    %v2499 = vunpack.c.l.b16 %v2115
    %v2500 = vunpack.c.h.b16 %v2115
    %v2501 = vunpack.c.l.b16 %v2116
    %v2502 = vunpack.c.h.b16 %v2116
    %v2503 = vunpack.c.l.b16 %v2117
    %v2504 = vunpack.c.h.b16 %v2117
    %v2505 = vunpack.c.l.b16 %v2118
    %v2506 = vunpack.c.h.b16 %v2118
    %v2507 = vunpack.c.l.b16 %v2119
    %v2508 = vunpack.c.h.b16 %v2119
    %v2509 = vunpack.c.l.b16 %v2120
    %v2510 = vunpack.c.h.b16 %v2120
    %v2511 = vunpack.c.l.b16 %v2121
    %v2512 = vunpack.c.h.b16 %v2121
    %v2513 = vunpack.c.l.b16 %v2122
    %v2514 = vunpack.c.h.b16 %v2122
    %v2515 = vunpack.c.l.b16 %v2123
    %v2516 = vunpack.c.h.b16 %v2123
    %v2517 = vunpack.c.l.b16 %v2124
    %v2518 = vunpack.c.h.b16 %v2124
    %v2519 = vunpack.c.l.b16 %v2125
    %v2520 = vunpack.c.h.b16 %v2125
    %v2521 = vunpack.c.l.b16 %v2126
    %v2522 = vunpack.c.h.b16 %v2126
    %v2523 = vunpack.c.l.b16 %v2127
    %v2524 = vunpack.c.h.b16 %v2127
    %v2525 = vunpack.c.l.b16 %v2128
    %v2526 = vunpack.c.h.b16 %v2128
    %v2527 = vunpack.c.l.b16 %v2129
    %v2528 = vunpack.c.h.b16 %v2129
    %v2529 = vunpack.c.l.b16 %v2130
    %v2530 = vunpack.c.h.b16 %v2130
    %v2531 = vunpack.c.l.b16 %v2131
    %v2532 = vunpack.c.h.b16 %v2131
    %v2533 = vunpack.c.l.b16 %v2132
    %v2534 = vunpack.c.h.b16 %v2132
    %v2535 = vunpack.c.l.b16 %v2133
    %v2536 = vunpack.c.h.b16 %v2133
    %v2537 = vunpack.c.l.b16 %v2134
    %v2538 = vunpack.c.h.b16 %v2134
    %v2539 = vunpack.c.l.b16 %v2135
    %v2540 = vunpack.c.h.b16 %v2135
    %v2541 = vunpack.c.l.b16 %v2136
    %v2542 = vunpack.c.h.b16 %v2136
    %v2543 = vpack.c.b16 %v2291, %v2287
    %v2544 = vpack.c.b16 %v2292, %v2288
    %v2545 = vpack.c.b16 %v2293, %v2289
    %v2546 = vpack.c.b16 %v2294, %v2290
    %v2547 = vpack.c.b16 %v2299, %v2295
    %v2548 = vpack.c.b16 %v2300, %v2296
    %v2549 = vpack.c.b16 %v2301, %v2297
    %v2550 = vpack.c.b16 %v2302, %v2298
    %v2551 = vpack.c.b16 %v2307, %v2303
    %v2552 = vpack.c.b16 %v2308, %v2304
    %v2553 = vpack.c.b16 %v2309, %v2305
    %v2554 = vpack.c.b16 %v2310, %v2306
    %v2555 = vpack.c.b16 %v2315, %v2311
    %v2556 = vpack.c.b16 %v2316, %v2312
    %v2557 = vpack.c.b16 %v2317, %v2313
    %v2558 = vpack.c.b16 %v2318, %v2314
    %v2559 = vpack.c.b16 %v2323, %v2319
    %v2560 = vpack.c.b16 %v2324, %v2320
    %v2561 = vpack.c.b16 %v2325, %v2321
    %v2562 = vpack.c.b16 %v2326, %v2322
    %v2563 = vpack.c.b16 %v2331, %v2327
    %v2564 = vpack.c.b16 %v2332, %v2328
    %v2565 = vpack.c.b16 %v2333, %v2329
    %v2566 = vpack.c.b16 %v2334, %v2330
    %v2567 = vpack.c.b16 %v2339, %v2335
    %v2568 = vpack.c.b16 %v2340, %v2336
    %v2569 = vpack.c.b16 %v2341, %v2337
    %v2570 = vpack.c.b16 %v2342, %v2338
    %v2571 = vpack.c.b16 %v2347, %v2343
    %v2572 = vpack.c.b16 %v2348, %v2344
    %v2573 = vpack.c.b16 %v2349, %v2345
    %v2574 = vpack.c.b16 %v2350, %v2346
    %v2575 = vpack.c.b16 %v2355, %v2351
    %v2576 = vpack.c.b16 %v2356, %v2352
    %v2577 = vpack.c.b16 %v2357, %v2353
    %v2578 = vpack.c.b16 %v2358, %v2354
    %v2579 = vpack.c.b16 %v2363, %v2359
    %v2580 = vpack.c.b16 %v2364, %v2360
    %v2581 = vpack.c.b16 %v2365, %v2361
    %v2582 = vpack.c.b16 %v2366, %v2362
    %v2583 = vpack.c.b16 %v2371, %v2367
    %v2584 = vpack.c.b16 %v2372, %v2368
    %v2585 = vpack.c.b16 %v2373, %v2369
    %v2586 = vpack.c.b16 %v2374, %v2370
    %v2587 = vpack.c.b16 %v2379, %v2375
    %v2588 = vpack.c.b16 %v2380, %v2376
    %v2589 = vpack.c.b16 %v2381, %v2377
    %v2590 = vpack.c.b16 %v2382, %v2378
    %v2591 = vpack.c.b16 %v2387, %v2383
    %v2592 = vpack.c.b16 %v2388, %v2384
    %v2593 = vpack.c.b16 %v2389, %v2385
    %v2594 = vpack.c.b16 %v2390, %v2386
    %v2595 = vpack.c.b16 %v2395, %v2391
    %v2596 = vpack.c.b16 %v2396, %v2392
    %v2597 = vpack.c.b16 %v2397, %v2393
    %v2598 = vpack.c.b16 %v2398, %v2394
    %v2599 = vpack.c.b16 %v2403, %v2399
    %v2600 = vpack.c.b16 %v2404, %v2400
    %v2601 = vpack.c.b16 %v2405, %v2401
    %v2602 = vpack.c.b16 %v2406, %v2402
    %v2603 = vpack.c.b16 %v2411, %v2407
    %v2604 = vpack.c.b16 %v2412, %v2408
    %v2605 = vpack.c.b16 %v2413, %v2409
    %v2606 = vpack.c.b16 %v2414, %v2410
    %v2607 = vpack.c.b16 %v2419, %v2415
    %v2608 = vpack.c.b16 %v2420, %v2416
    %v2609 = vpack.c.b16 %v2421, %v2417
    %v2610 = vpack.c.b16 %v2422, %v2418
    %v2611 = vpack.c.b16 %v2427, %v2423
    %v2612 = vpack.c.b16 %v2428, %v2424
    %v2613 = vpack.c.b16 %v2429, %v2425
    %v2614 = vpack.c.b16 %v2430, %v2426
    %v2615 = vpack.c.b16 %v2435, %v2431
    %v2616 = vpack.c.b16 %v2436, %v2432
    %v2617 = vpack.c.b16 %v2437, %v2433
    %v2618 = vpack.c.b16 %v2438, %v2434
    %v2619 = vpack.c.b16 %v2443, %v2439
    %v2620 = vpack.c.b16 %v2444, %v2440
    %v2621 = vpack.c.b16 %v2445, %v2441
    %v2622 = vpack.c.b16 %v2446, %v2442
    %v2623 = vpack.c.b16 %v2451, %v2447
    %v2624 = vpack.c.b16 %v2452, %v2448
    %v2625 = vpack.c.b16 %v2453, %v2449
    %v2626 = vpack.c.b16 %v2454, %v2450
    %v2627 = vpack.c.b16 %v2459, %v2455
    %v2628 = vpack.c.b16 %v2460, %v2456
    %v2629 = vpack.c.b16 %v2461, %v2457
    %v2630 = vpack.c.b16 %v2462, %v2458
    %v2631 = vpack.c.b16 %v2467, %v2463
    %v2632 = vpack.c.b16 %v2468, %v2464
    %v2633 = vpack.c.b16 %v2469, %v2465
    %v2634 = vpack.c.b16 %v2470, %v2466
    %v2635 = vpack.c.b16 %v2475, %v2471
    %v2636 = vpack.c.b16 %v2476, %v2472
    %v2637 = vpack.c.b16 %v2477, %v2473
    %v2638 = vpack.c.b16 %v2478, %v2474
    %v2639 = vpack.c.b16 %v2483, %v2479
    %v2640 = vpack.c.b16 %v2484, %v2480
    %v2641 = vpack.c.b16 %v2485, %v2481
    %v2642 = vpack.c.b16 %v2486, %v2482
    %v2643 = vpack.c.b16 %v2491, %v2487
    %v2644 = vpack.c.b16 %v2492, %v2488
    %v2645 = vpack.c.b16 %v2493, %v2489
    %v2646 = vpack.c.b16 %v2494, %v2490
    %v2647 = vpack.c.b16 %v2499, %v2495
    %v2648 = vpack.c.b16 %v2500, %v2496
    %v2649 = vpack.c.b16 %v2501, %v2497
    %v2650 = vpack.c.b16 %v2502, %v2498
    %v2651 = vpack.c.b16 %v2507, %v2503
    %v2652 = vpack.c.b16 %v2508, %v2504
    %v2653 = vpack.c.b16 %v2509, %v2505
    %v2654 = vpack.c.b16 %v2510, %v2506
    %v2655 = vpack.c.b16 %v2515, %v2511
    %v2656 = vpack.c.b16 %v2516, %v2512
    %v2657 = vpack.c.b16 %v2517, %v2513
    %v2658 = vpack.c.b16 %v2518, %v2514
    %v2659 = vpack.c.b16 %v2523, %v2519
    %v2660 = vpack.c.b16 %v2524, %v2520
    %v2661 = vpack.c.b16 %v2525, %v2521
    %v2662 = vpack.c.b16 %v2526, %v2522
    %v2663 = vpack.c.b16 %v2531, %v2527
    %v2664 = vpack.c.b16 %v2532, %v2528
    %v2665 = vpack.c.b16 %v2533, %v2529
    %v2666 = vpack.c.b16 %v2534, %v2530
    %v2667 = vpack.c.b16 %v2539, %v2535
    %v2668 = vpack.c.b16 %v2540, %v2536
    %v2669 = vpack.c.b16 %v2541, %v2537
    %v2670 = vpack.c.b16 %v2542, %v2538
    %2799 = vmatprep.subr.bf16.mxu0 %v2544
    %2800 = vmatpush1.bf16.msra.mxu0 %v2543
    %2801 = vmatprep.subr.bf16.mxu0 %v2548
    %2802 = vmatpush1.bf16.msra.mxu0 %v2547
    %2803 = vmatprep.subr.bf16.mxu0 %v2552
    %2804 = vmatpush1.bf16.msra.mxu0 %v2551
    %2805 = vmatprep.subr.bf16.mxu0 %v2556
    %2806 = vmatpush1.bf16.msra.mxu0 %v2555
    %2807 = vmatprep.subr.bf16.mxu0 %v2560
    %2808 = vmatpush1.bf16.msra.mxu0 %v2559
    %2809 = vmatprep.subr.bf16.mxu0 %v2564
    %2810 = vmatpush1.bf16.msra.mxu0 %v2563
    %2811 = vmatprep.subr.bf16.mxu0 %v2568
    %2812 = vmatpush1.bf16.msra.mxu0 %v2567
    %2813 = vmatprep.subr.bf16.mxu0 %v2572
    %2814 = vmatpush1.bf16.msra.mxu0 %v2571
    %2815 = vmatprep.subr.bf16.mxu0 %v2576
    %2816 = vmatpush1.bf16.msra.mxu0 %v2575
    %2817 = vmatprep.subr.bf16.mxu0 %v2580
    %2818 = vmatpush1.bf16.msra.mxu0 %v2579
    %2819 = vmatprep.subr.bf16.mxu0 %v2584
    %2820 = vmatpush1.bf16.msra.mxu0 %v2583
    %2821 = vmatprep.subr.bf16.mxu0 %v2588
    %2822 = vmatpush1.bf16.msra.mxu0 %v2587
    %2823 = vmatprep.subr.bf16.mxu0 %v2592
    %2824 = vmatpush1.bf16.msra.mxu0 %v2591
    %2825 = vmatprep.subr.bf16.mxu0 %v2596
    %2826 = vmatpush1.bf16.msra.mxu0 %v2595
    %2827 = vmatprep.subr.bf16.mxu0 %v2600
    %2828 = vmatpush1.bf16.msra.mxu0 %v2599
    %2829 = vmatprep.subr.bf16.mxu0 %v2604
    %2830 = vmatpush1.bf16.msra.mxu0 %v2603
    %2831 = vmatprep.mubr.bf16.mxu0 %v1994
    %2832 = vmatmul.mubr.bf16.gmra.mrb[0].mxu0 %v1993
    %v2833 = vpop.f32.mrb[0].mxu0
    %v2834 = vadd.f32 %v2142, %v2833
    %v2835 = vpop.f32.mrb[0].mxu0
    %v2836 = vadd.f32 %v2146, %v2835
    %v2837 = vpop.f32.mrb[0].mxu0
    %v2838 = vadd.f32 %v2142, %v2837
    %v2839 = vpop.f32.mrb[0].mxu0
    %v2840 = vadd.f32 %v2146, %v2839
    %2841 = vmatprep.mubr.bf16.mxu0 %v1998
    %2842 = vmatmul.mubr.bf16.gmra.mrb[0].mxu0 %v1997
    %v2843 = vpop.f32.mrb[0].mxu0
    %v2844 = vadd.f32 %v2142, %v2843
    %v2845 = vpop.f32.mrb[0].mxu0
    %v2846 = vadd.f32 %v2146, %v2845
    %v2847 = vpop.f32.mrb[0].mxu0
    %v2848 = vadd.f32 %v2142, %v2847
    %v2849 = vpop.f32.mrb[0].mxu0
    %v2850 = vadd.f32 %v2146, %v2849
    %2851 = vmatprep.mubr.bf16.mxu0 %v2002
    %2852 = vmatmul.mubr.bf16.gmra.mrb[0].mxu0 %v2001
    %v2853 = vpop.f32.mrb[0].mxu0
    %v2854 = vadd.f32 %v2142, %v2853
    %v2855 = vpop.f32.mrb[0].mxu0
    %v2856 = vadd.f32 %v2146, %v2855
    %v2857 = vpop.f32.mrb[0].mxu0
    %v2858 = vadd.f32 %v2142, %v2857
    %v2859 = vpop.f32.mrb[0].mxu0
    %v2860 = vadd.f32 %v2146, %v2859
    %2861 = vmatprep.mubr.bf16.mxu0 %v2006
    %2862 = vmatmul.mubr.bf16.gmra.mrb[0].mxu0 %v2005
    %v2863 = vpop.f32.mrb[0].mxu0
    %v2864 = vadd.f32 %v2142, %v2863
    %v2865 = vpop.f32.mrb[0].mxu0
    %v2866 = vadd.f32 %v2146, %v2865
    %v2867 = vpop.f32.mrb[0].mxu0
    %v2868 = vadd.f32 %v2142, %v2867
    %v2869 = vpop.f32.mrb[0].mxu0
    %v2870 = vadd.f32 %v2146, %v2869
    %2871 = vdwg.mxu0
    %2872 = vmatprep.subr.bf16.mxu0 %v2608
    %2873 = vmatpush1.bf16.msra.mxu0 %v2607
    %2874 = vmatprep.subr.bf16.mxu0 %v2612
    %2875 = vmatpush1.bf16.msra.mxu0 %v2611
    %2876 = vmatprep.subr.bf16.mxu0 %v2616
    %2877 = vmatpush1.bf16.msra.mxu0 %v2615
    %2878 = vmatprep.subr.bf16.mxu0 %v2620
    %2879 = vmatpush1.bf16.msra.mxu0 %v2619
    %2880 = vmatprep.subr.bf16.mxu0 %v2624
    %2881 = vmatpush1.bf16.msra.mxu0 %v2623
    %2882 = vmatprep.subr.bf16.mxu0 %v2628
    %2883 = vmatpush1.bf16.msra.mxu0 %v2627
    %2884 = vmatprep.subr.bf16.mxu0 %v2632
    %2885 = vmatpush1.bf16.msra.mxu0 %v2631
    %2886 = vmatprep.subr.bf16.mxu0 %v2636
    %2887 = vmatpush1.bf16.msra.mxu0 %v2635
    %2888 = vmatprep.subr.bf16.mxu0 %v2640
    %2889 = vmatpush1.bf16.msra.mxu0 %v2639
    %2890 = vmatprep.subr.bf16.mxu0 %v2644
    %2891 = vmatpush1.bf16.msra.mxu0 %v2643
    %2892 = vmatprep.subr.bf16.mxu0 %v2648
    %2893 = vmatpush1.bf16.msra.mxu0 %v2647
    %2894 = vmatprep.subr.bf16.mxu0 %v2652
    %2895 = vmatpush1.bf16.msra.mxu0 %v2651
    %2896 = vmatprep.subr.bf16.mxu0 %v2656
    %2897 = vmatpush1.bf16.msra.mxu0 %v2655
    %2898 = vmatprep.subr.bf16.mxu0 %v2660
    %2899 = vmatpush1.bf16.msra.mxu0 %v2659
    %2900 = vmatprep.subr.bf16.mxu0 %v2664
    %2901 = vmatpush1.bf16.msra.mxu0 %v2663
    %2902 = vmatprep.subr.bf16.mxu0 %v2668
    %2903 = vmatpush1.bf16.msra.mxu0 %v2667
    %2904 = vmatprep.mubr.bf16.mxu0 %v1996
    %2905 = vmatmul.mubr.bf16.gmra.mrb[0].mxu0 %v1995
    %v2906 = vpop.f32.mrb[0].mxu0
    %v2907 = vadd.f32 %v2834, %v2906
    %v2908 = vpop.f32.mrb[0].mxu0
    %v2909 = vadd.f32 %v2836, %v2908
    %v2910 = vpop.f32.mrb[0].mxu0
    %v2911 = vadd.f32 %v2838, %v2910
    %v2912 = vpop.f32.mrb[0].mxu0
    %v2913 = vadd.f32 %v2840, %v2912
    %2914 = vmatprep.mubr.bf16.mxu0 %v2000
    %2915 = vmatmul.mubr.bf16.gmra.mrb[0].mxu0 %v1999
    %v2916 = vpop.f32.mrb[0].mxu0
    %v2917 = vadd.f32 %v2844, %v2916
    %v2918 = vpop.f32.mrb[0].mxu0
    %v2919 = vadd.f32 %v2846, %v2918
    %v2920 = vpop.f32.mrb[0].mxu0
    %v2921 = vadd.f32 %v2848, %v2920
    %v2922 = vpop.f32.mrb[0].mxu0
    %v2923 = vadd.f32 %v2850, %v2922
    %2924 = vmatprep.mubr.bf16.mxu0 %v2004
    %2925 = vmatmul.mubr.bf16.gmra.mrb[0].mxu0 %v2003
    %v2926 = vpop.f32.mrb[0].mxu0
    %v2927 = vadd.f32 %v2854, %v2926
    %v2928 = vpop.f32.mrb[0].mxu0
    %v2929 = vadd.f32 %v2856, %v2928
    %v2930 = vpop.f32.mrb[0].mxu0
    %v2931 = vadd.f32 %v2858, %v2930
    %v2932 = vpop.f32.mrb[0].mxu0
    %v2933 = vadd.f32 %v2860, %v2932
    %2934 = vmatprep.mubr.bf16.mxu0 %v2008
    %2935 = vmatmul.mubr.bf16.gmra.mrb[0].mxu0 %v2007
    %v2936 = vpop.f32.mrb[0].mxu0
    %v2937 = vadd.f32 %v2864, %v2936
    %v2938 = vpop.f32.mrb[0].mxu0
    %v2939 = vadd.f32 %v2866, %v2938
    %v2940 = vpop.f32.mrb[0].mxu0
    %v2941 = vadd.f32 %v2868, %v2940
    %v2942 = vpop.f32.mrb[0].mxu0
    %v2943 = vadd.f32 %v2870, %v2942
    %2944 = vdwg.mxu0
    %2945 = vmatprep.subr.bf16.mxu0 %v2546
    %2946 = vmatpush1.bf16.msra.mxu0 %v2545
    %2947 = vmatprep.subr.bf16.mxu0 %v2550
    %2948 = vmatpush1.bf16.msra.mxu0 %v2549
    %2949 = vmatprep.subr.bf16.mxu0 %v2554
    %2950 = vmatpush1.bf16.msra.mxu0 %v2553
    %2951 = vmatprep.subr.bf16.mxu0 %v2558
    %2952 = vmatpush1.bf16.msra.mxu0 %v2557
    %2953 = vmatprep.subr.bf16.mxu0 %v2562
    %2954 = vmatpush1.bf16.msra.mxu0 %v2561
    %2955 = vmatprep.subr.bf16.mxu0 %v2566
    %2956 = vmatpush1.bf16.msra.mxu0 %v2565
    %2957 = vmatprep.subr.bf16.mxu0 %v2570
    %2958 = vmatpush1.bf16.msra.mxu0 %v2569
    %2959 = vmatprep.subr.bf16.mxu0 %v2574
    %2960 = vmatpush1.bf16.msra.mxu0 %v2573
    %2961 = vmatprep.subr.bf16.mxu0 %v2578
    %2962 = vmatpush1.bf16.msra.mxu0 %v2577
    %2963 = vmatprep.subr.bf16.mxu0 %v2582
    %2964 = vmatpush1.bf16.msra.mxu0 %v2581
    %2965 = vmatprep.subr.bf16.mxu0 %v2586
    %2966 = vmatpush1.bf16.msra.mxu0 %v2585
    %2967 = vmatprep.subr.bf16.mxu0 %v2590
    %2968 = vmatpush1.bf16.msra.mxu0 %v2589
    %2969 = vmatprep.subr.bf16.mxu0 %v2594
    %2970 = vmatpush1.bf16.msra.mxu0 %v2593
    %2971 = vmatprep.subr.bf16.mxu0 %v2598
    %2972 = vmatpush1.bf16.msra.mxu0 %v2597
    %2973 = vmatprep.subr.bf16.mxu0 %v2602
    %2974 = vmatpush1.bf16.msra.mxu0 %v2601
    %2975 = vmatprep.subr.bf16.mxu0 %v2606
    %2976 = vmatpush1.bf16.msra.mxu0 %v2605
    %2977 = vmatprep.mubr.bf16.mxu0 %v1994
    %2978 = vmatmul.mubr.bf16.gmra.mrb[0].mxu0 %v1993
    %v2979 = vpop.f32.mrb[0].mxu0
    %v2980 = vadd.f32 %v2150, %v2979
    %v2981 = vpop.f32.mrb[0].mxu0
    %v2982 = vadd.f32 %v2154, %v2981
    %v2983 = vpop.f32.mrb[0].mxu0
    %v2984 = vadd.f32 %v2150, %v2983
    %v2985 = vpop.f32.mrb[0].mxu0
    %v2986 = vadd.f32 %v2154, %v2985
    %2987 = vmatprep.mubr.bf16.mxu0 %v1998
    %2988 = vmatmul.mubr.bf16.gmra.mrb[0].mxu0 %v1997
    %v2989 = vpop.f32.mrb[0].mxu0
    %v2990 = vadd.f32 %v2150, %v2989
    %v2991 = vpop.f32.mrb[0].mxu0
    %v2992 = vadd.f32 %v2154, %v2991
    %v2993 = vpop.f32.mrb[0].mxu0
    %v2994 = vadd.f32 %v2150, %v2993
    %v2995 = vpop.f32.mrb[0].mxu0
    %v2996 = vadd.f32 %v2154, %v2995
    %2997 = vmatprep.mubr.bf16.mxu0 %v2002
    %2998 = vmatmul.mubr.bf16.gmra.mrb[0].mxu0 %v2001
    %v2999 = vpop.f32.mrb[0].mxu0
    %v3000 = vadd.f32 %v2150, %v2999
    %v3001 = vpop.f32.mrb[0].mxu0
    %v3002 = vadd.f32 %v2154, %v3001
    %v3003 = vpop.f32.mrb[0].mxu0
    %v3004 = vadd.f32 %v2150, %v3003
    %v3005 = vpop.f32.mrb[0].mxu0
    %v3006 = vadd.f32 %v2154, %v3005
    %3007 = vmatprep.mubr.bf16.mxu0 %v2006
    %3008 = vmatmul.mubr.bf16.gmra.mrb[0].mxu0 %v2005
    %v3009 = vpop.f32.mrb[0].mxu0
    %v3010 = vadd.f32 %v2150, %v3009
    %v3011 = vpop.f32.mrb[0].mxu0
    %v3012 = vadd.f32 %v2154, %v3011
    %v3013 = vpop.f32.mrb[0].mxu0
    %v3014 = vadd.f32 %v2150, %v3013
    %v3015 = vpop.f32.mrb[0].mxu0
    %v3016 = vadd.f32 %v2154, %v3015
    %3017 = vdwg.mxu0
    %3018 = vmatprep.subr.bf16.mxu0 %v2610
    %3019 = vmatpush1.bf16.msra.mxu0 %v2609
    %3020 = vmatprep.subr.bf16.mxu0 %v2614
    %3021 = vmatpush1.bf16.msra.mxu0 %v2613
    %3022 = vmatprep.subr.bf16.mxu0 %v2618
    %3023 = vmatpush1.bf16.msra.mxu0 %v2617
    %3024 = vmatprep.subr.bf16.mxu0 %v2622
    %3025 = vmatpush1.bf16.msra.mxu0 %v2621
    %3026 = vmatprep.subr.bf16.mxu0 %v2626
    %3027 = vmatpush1.bf16.msra.mxu0 %v2625
    %3028 = vmatprep.subr.bf16.mxu0 %v2630
    %3029 = vmatpush1.bf16.msra.mxu0 %v2629
    %3030 = vmatprep.subr.bf16.mxu0 %v2634
    %3031 = vmatpush1.bf16.msra.mxu0 %v2633
    %3032 = vmatprep.subr.bf16.mxu0 %v2638
    %3033 = vmatpush1.bf16.msra.mxu0 %v2637
    %3034 = vmatprep.subr.bf16.mxu0 %v2642
    %3035 = vmatpush1.bf16.msra.mxu0 %v2641
    %3036 = vmatprep.subr.bf16.mxu0 %v2646
    %3037 = vmatpush1.bf16.msra.mxu0 %v2645
    %3038 = vmatprep.subr.bf16.mxu0 %v2650
    %3039 = vmatpush1.bf16.msra.mxu0 %v2649
    %3040 = vmatprep.subr.bf16.mxu0 %v2654
    %3041 = vmatpush1.bf16.msra.mxu0 %v2653
    %3042 = vmatprep.subr.bf16.mxu0 %v2658
    %3043 = vmatpush1.bf16.msra.mxu0 %v2657
    %3044 = vmatprep.subr.bf16.mxu0 %v2662
    %3045 = vmatpush1.bf16.msra.mxu0 %v2661
    %3046 = vmatprep.subr.bf16.mxu0 %v2666
    %3047 = vmatpush1.bf16.msra.mxu0 %v2665
    %3048 = vmatprep.subr.bf16.mxu0 %v2670
    %3049 = vmatpush1.bf16.msra.mxu0 %v2669
    %3050 = vmatprep.mubr.bf16.mxu0 %v1996
    %3051 = vmatmul.mubr.bf16.gmra.mrb[0].mxu0 %v1995
    %v3052 = vpop.f32.mrb[0].mxu0
    %v3053 = vadd.f32 %v2980, %v3052
    %v3054 = vpop.f32.mrb[0].mxu0
    %v3055 = vadd.f32 %v2982, %v3054
    %v3056 = vpop.f32.mrb[0].mxu0
    %v3057 = vadd.f32 %v2984, %v3056
    %v3058 = vpop.f32.mrb[0].mxu0
    %v3059 = vadd.f32 %v2986, %v3058
    %3060 = vmatprep.mubr.bf16.mxu0 %v2000
    %3061 = vmatmul.mubr.bf16.gmra.mrb[0].mxu0 %v1999
    %v3062 = vpop.f32.mrb[0].mxu0
    %v3063 = vadd.f32 %v2990, %v3062
    %v3064 = vpop.f32.mrb[0].mxu0
    %v3065 = vadd.f32 %v2992, %v3064
    %v3066 = vpop.f32.mrb[0].mxu0
    %v3067 = vadd.f32 %v2994, %v3066
    %v3068 = vpop.f32.mrb[0].mxu0
    %v3069 = vadd.f32 %v2996, %v3068
    %3070 = vmatprep.mubr.bf16.mxu0 %v2004
    %3071 = vmatmul.mubr.bf16.gmra.mrb[0].mxu0 %v2003
    %v3072 = vpop.f32.mrb[0].mxu0
    %v3073 = vadd.f32 %v3000, %v3072
    %v3074 = vpop.f32.mrb[0].mxu0
    %v3075 = vadd.f32 %v3002, %v3074
    %v3076 = vpop.f32.mrb[0].mxu0
    %v3077 = vadd.f32 %v3004, %v3076
    %v3078 = vpop.f32.mrb[0].mxu0
    %v3079 = vadd.f32 %v3006, %v3078
    %3080 = vmatprep.mubr.bf16.mxu0 %v2008
    %3081 = vmatmul.mubr.bf16.gmra.mrb[0].mxu0 %v2007
    %v3082 = vpop.f32.mrb[0].mxu0
    %v3083 = vadd.f32 %v3010, %v3082
    %v3084 = vpop.f32.mrb[0].mxu0
    %v3085 = vadd.f32 %v3012, %v3084
    %v3086 = vpop.f32.mrb[0].mxu0
    %v3087 = vadd.f32 %v3014, %v3086
    %v3088 = vpop.f32.mrb[0].mxu0
    %v3089 = vadd.f32 %v3016, %v3088
    %3090 = vdwg.mxu0
    %v3091 = vmax.f32 %v2907, 0.0
    %v3092 = vmax.f32 %v2909, 0.0
    %v3093 = vmax.f32 %v3053, 0.0
    %v3094 = vmax.f32 %v3055, 0.0
    %v3095 = vmax.f32 %v2911, 0.0
    %v3096 = vmax.f32 %v2913, 0.0
    %v3097 = vmax.f32 %v3057, 0.0
    %v3098 = vmax.f32 %v3059, 0.0
    %v3099 = vmax.f32 %v2917, 0.0
    %v3100 = vmax.f32 %v2919, 0.0
    %v3101 = vmax.f32 %v3063, 0.0
    %v3102 = vmax.f32 %v3065, 0.0
    %v3103 = vmax.f32 %v2921, 0.0
    %v3104 = vmax.f32 %v2923, 0.0
    %v3105 = vmax.f32 %v3067, 0.0
    %v3106 = vmax.f32 %v3069, 0.0
    %v3107 = vmax.f32 %v2927, 0.0
    %v3108 = vmax.f32 %v2929, 0.0
    %v3109 = vmax.f32 %v3073, 0.0
    %v3110 = vmax.f32 %v3075, 0.0
    %v3111 = vmax.f32 %v2931, 0.0
    %v3112 = vmax.f32 %v2933, 0.0
    %v3113 = vmax.f32 %v3077, 0.0
    %v3114 = vmax.f32 %v3079, 0.0
    %v3115 = vmax.f32 %v2937, 0.0
    %v3116 = vmax.f32 %v2939, 0.0
    %v3117 = vmax.f32 %v3083, 0.0
    %v3118 = vmax.f32 %v3085, 0.0
    %v3119 = vmax.f32 %v2941, 0.0
    %v3120 = vmax.f32 %v2943, 0.0
    %v3121 = vmax.f32 %v3087, 0.0
    %v3122 = vmax.f32 %v3089, 0.0
    %v3123 = vpack.c.bf16 %v3095, %v3091
    %v3124 = vpack.c.bf16 %v3096, %v3092
    %v3125 = vpack.c.bf16 %v3097, %v3093
    %v3126 = vpack.c.bf16 %v3098, %v3094
    %v3127 = vpack.c.bf16 %v3103, %v3099
    %v3128 = vpack.c.bf16 %v3104, %v3100
    %v3129 = vpack.c.bf16 %v3105, %v3101
    %v3130 = vpack.c.bf16 %v3106, %v3102
    %v3131 = vpack.c.bf16 %v3111, %v3107
    %v3132 = vpack.c.bf16 %v3112, %v3108
    %v3133 = vpack.c.bf16 %v3113, %v3109
    %v3134 = vpack.c.bf16 %v3114, %v3110
    %v3135 = vpack.c.bf16 %v3119, %v3115
    %v3136 = vpack.c.bf16 %v3120, %v3116
    %v3137 = vpack.c.bf16 %v3121, %v3117
    %v3138 = vpack.c.bf16 %v3122, %v3118
    %v3139 = vld [vmem:[#allocation7] sm:$0xf]
    %v3140 = vld [vmem:[#allocation7 + $0x4] sm:$0xf]
    %v3141 = vld [vmem:[#allocation7 + $0x8] sm:$0xf]
    %v3142 = vld [vmem:[#allocation7 + $0xc] sm:$0xf]
    %v3143 = vld [vmem:[#allocation7 + $0x10] sm:$0xf]
    %v3144 = vld [vmem:[#allocation7 + $0x14] sm:$0xf]
    %v3145 = vld [vmem:[#allocation7 + $0x18] sm:$0xf]
    %v3146 = vld [vmem:[#allocation7 + $0x1c] sm:$0xf]
    %v3147 = vld [vmem:[#allocation7 + $0x20] sm:$0xf]
    %v3148 = vld [vmem:[#allocation7 + $0x24] sm:$0xf]
    %v3149 = vld [vmem:[#allocation7 + $0x28] sm:$0xf]
    %v3150 = vld [vmem:[#allocation7 + $0x2c] sm:$0xf]
    %v3151 = vld [vmem:[#allocation7 + $0x30] sm:$0xf]
    %v3152 = vld [vmem:[#allocation7 + $0x34] sm:$0xf]
    %v3153 = vld [vmem:[#allocation7 + $0x38] sm:$0xf]
    %v3154 = vld [vmem:[#allocation7 + $0x3c] sm:$0xf]
    %v3155 = vld [vmem:[#allocation7 + $0x40] sm:$0xf]
    %v3156 = vld [vmem:[#allocation7 + $0x44] sm:$0xf]
    %v3157 = vld [vmem:[#allocation7 + $0x48] sm:$0xf]
    %v3158 = vld [vmem:[#allocation7 + $0x4c] sm:$0xf]
    %v3159 = vld [vmem:[#allocation7 + $0x50] sm:$0xf]
    %v3160 = vld [vmem:[#allocation7 + $0x54] sm:$0xf]
    %v3161 = vld [vmem:[#allocation7 + $0x58] sm:$0xf]
    %v3162 = vld [vmem:[#allocation7 + $0x5c] sm:$0xf]
    %v3163 = vld [vmem:[#allocation7 + $0x60] sm:$0xf]
    %v3164 = vld [vmem:[#allocation7 + $0x64] sm:$0xf]
    %v3165 = vld [vmem:[#allocation7 + $0x68] sm:$0xf]
    %v3166 = vld [vmem:[#allocation7 + $0x6c] sm:$0xf]
    %v3167 = vld [vmem:[#allocation7 + $0x70] sm:$0xf]
    %v3168 = vld [vmem:[#allocation7 + $0x74] sm:$0xf]
    %v3169 = vld [vmem:[#allocation7 + $0x78] sm:$0xf]
    %v3170 = vld [vmem:[#allocation7 + $0x7c] sm:$0xf]
    %v3171 = vld [vmem:[#allocation7 + $0x80] sm:$0xf]
    %v3172 = vld [vmem:[#allocation7 + $0x84] sm:$0xf]
    %v3173 = vld [vmem:[#allocation7 + $0x88] sm:$0xf]
    %v3174 = vld [vmem:[#allocation7 + $0x8c] sm:$0xf]
    %v3175 = vld [vmem:[#allocation7 + $0x90] sm:$0xf]
    %v3176 = vld [vmem:[#allocation7 + $0x94] sm:$0xf]
    %v3177 = vld [vmem:[#allocation7 + $0x98] sm:$0xf]
    %v3178 = vld [vmem:[#allocation7 + $0x9c] sm:$0xf]
    %v3179 = vld [vmem:[#allocation7 + $0xa0] sm:$0xf]
    %v3180 = vld [vmem:[#allocation7 + $0xa4] sm:$0xf]
    %v3181 = vld [vmem:[#allocation7 + $0xa8] sm:$0xf]
    %v3182 = vld [vmem:[#allocation7 + $0xac] sm:$0xf]
    %v3183 = vld [vmem:[#allocation7 + $0xb0] sm:$0xf]
    %v3184 = vld [vmem:[#allocation7 + $0xb4] sm:$0xf]
    %v3185 = vld [vmem:[#allocation7 + $0xb8] sm:$0xf]
    %v3186 = vld [vmem:[#allocation7 + $0xbc] sm:$0xf]
    %v3187 = vld [vmem:[#allocation7 + $0xc0] sm:$0xf]
    %v3188 = vld [vmem:[#allocation7 + $0xc4] sm:$0xf]
    %v3189 = vld [vmem:[#allocation7 + $0xc8] sm:$0xf]
    %v3190 = vld [vmem:[#allocation7 + $0xcc] sm:$0xf]
    %v3191 = vld [vmem:[#allocation7 + $0xd0] sm:$0xf]
    %v3192 = vld [vmem:[#allocation7 + $0xd4] sm:$0xf]
    %v3193 = vld [vmem:[#allocation7 + $0xd8] sm:$0xf]
    %v3194 = vld [vmem:[#allocation7 + $0xdc] sm:$0xf]
    %v3195 = vld [vmem:[#allocation7 + $0xe0] sm:$0xf]
    %v3196 = vld [vmem:[#allocation7 + $0xe4] sm:$0xf]
    %v3197 = vld [vmem:[#allocation7 + $0xe8] sm:$0xf]
    %v3198 = vld [vmem:[#allocation7 + $0xec] sm:$0xf]
    %v3199 = vld [vmem:[#allocation7 + $0xf0] sm:$0xf]
    %v3200 = vld [vmem:[#allocation7 + $0xf4] sm:$0xf]
    %v3201 = vld [vmem:[#allocation7 + $0xf8] sm:$0xf]
    %v3202 = vld [vmem:[#allocation7 + $0xfc] sm:$0xf]
    %v3203 = vld [vmem:[%s6] sm:$0x1]
    %v3205 = vlaneseq
    %v3206 = vshrl.u32 %v3205, 7
    %v3207 = vsub.s32 0, %v3206
    %v3208 = vrot.slane %v3203, %v3207
    %v3274 = vunpack.c.l.b16 %v3139
    %v3275 = vunpack.c.l.b16 %v3140
    %v3276 = vunpack.c.l.b16 %v3141
    %v3277 = vunpack.c.l.b16 %v3142
    %v3278 = vunpack.c.l.b16 %v3143
    %v3279 = vunpack.c.l.b16 %v3144
    %v3280 = vunpack.c.l.b16 %v3145
    %v3281 = vunpack.c.l.b16 %v3146
    %v3282 = vunpack.c.l.b16 %v3147
    %v3283 = vunpack.c.l.b16 %v3148
    %v3284 = vunpack.c.l.b16 %v3149
    %v3285 = vunpack.c.l.b16 %v3150
    %v3286 = vunpack.c.l.b16 %v3151
    %v3287 = vunpack.c.l.b16 %v3152
    %v3288 = vunpack.c.l.b16 %v3153
    %v3289 = vunpack.c.l.b16 %v3154
    %v3290 = vunpack.c.l.b16 %v3155
    %v3291 = vunpack.c.l.b16 %v3156
    %v3292 = vunpack.c.l.b16 %v3157
    %v3293 = vunpack.c.l.b16 %v3158
    %v3294 = vunpack.c.l.b16 %v3159
    %v3295 = vunpack.c.l.b16 %v3160
    %v3296 = vunpack.c.l.b16 %v3161
    %v3297 = vunpack.c.l.b16 %v3162
    %v3298 = vunpack.c.l.b16 %v3163
    %v3299 = vunpack.c.l.b16 %v3164
    %v3300 = vunpack.c.l.b16 %v3165
    %v3301 = vunpack.c.l.b16 %v3166
    %v3302 = vunpack.c.l.b16 %v3167
    %v3303 = vunpack.c.l.b16 %v3168
    %v3304 = vunpack.c.l.b16 %v3169
    %v3305 = vunpack.c.l.b16 %v3170
    %v3306 = vunpack.c.l.b16 %v3171
    %v3307 = vunpack.c.l.b16 %v3172
    %v3308 = vunpack.c.l.b16 %v3173
    %v3309 = vunpack.c.l.b16 %v3174
    %v3310 = vunpack.c.l.b16 %v3175
    %v3311 = vunpack.c.l.b16 %v3176
    %v3312 = vunpack.c.l.b16 %v3177
    %v3313 = vunpack.c.l.b16 %v3178
    %v3314 = vunpack.c.l.b16 %v3179
    %v3315 = vunpack.c.l.b16 %v3180
    %v3316 = vunpack.c.l.b16 %v3181
    %v3317 = vunpack.c.l.b16 %v3182
    %v3318 = vunpack.c.l.b16 %v3183
    %v3319 = vunpack.c.l.b16 %v3184
    %v3320 = vunpack.c.l.b16 %v3185
    %v3321 = vunpack.c.l.b16 %v3186
    %v3322 = vunpack.c.l.b16 %v3187
    %v3323 = vunpack.c.l.b16 %v3188
    %v3324 = vunpack.c.l.b16 %v3189
    %v3325 = vunpack.c.l.b16 %v3190
    %v3326 = vunpack.c.l.b16 %v3191
    %v3327 = vunpack.c.l.b16 %v3192
    %v3328 = vunpack.c.l.b16 %v3193
    %v3329 = vunpack.c.l.b16 %v3194
    %v3330 = vunpack.c.l.b16 %v3195
    %v3331 = vunpack.c.l.b16 %v3196
    %v3332 = vunpack.c.l.b16 %v3197
    %v3333 = vunpack.c.l.b16 %v3198
    %v3334 = vunpack.c.l.b16 %v3199
    %v3335 = vunpack.c.l.b16 %v3200
    %v3336 = vunpack.c.l.b16 %v3201
    %v3337 = vunpack.c.l.b16 %v3202
    %v3338 = vpack.c.b16 %v3275, %v3274
    %v3339 = vpack.c.b16 %v3277, %v3276
    %v3340 = vpack.c.b16 %v3279, %v3278
    %v3341 = vpack.c.b16 %v3281, %v3280
    %v3342 = vpack.c.b16 %v3283, %v3282
    %v3343 = vpack.c.b16 %v3285, %v3284
    %v3344 = vpack.c.b16 %v3287, %v3286
    %v3345 = vpack.c.b16 %v3289, %v3288
    %v3346 = vpack.c.b16 %v3291, %v3290
    %v3347 = vpack.c.b16 %v3293, %v3292
    %v3348 = vpack.c.b16 %v3295, %v3294
    %v3349 = vpack.c.b16 %v3297, %v3296
    %v3350 = vpack.c.b16 %v3299, %v3298
    %v3351 = vpack.c.b16 %v3301, %v3300
    %v3352 = vpack.c.b16 %v3303, %v3302
    %v3353 = vpack.c.b16 %v3305, %v3304
    %v3354 = vpack.c.b16 %v3307, %v3306
    %v3355 = vpack.c.b16 %v3309, %v3308
    %v3356 = vpack.c.b16 %v3311, %v3310
    %v3357 = vpack.c.b16 %v3313, %v3312
    %v3358 = vpack.c.b16 %v3315, %v3314
    %v3359 = vpack.c.b16 %v3317, %v3316
    %v3360 = vpack.c.b16 %v3319, %v3318
    %v3361 = vpack.c.b16 %v3321, %v3320
    %v3362 = vpack.c.b16 %v3323, %v3322
    %v3363 = vpack.c.b16 %v3325, %v3324
    %v3364 = vpack.c.b16 %v3327, %v3326
    %v3365 = vpack.c.b16 %v3329, %v3328
    %v3366 = vpack.c.b16 %v3331, %v3330
    %v3367 = vpack.c.b16 %v3333, %v3332
    %v3368 = vpack.c.b16 %v3335, %v3334
    %v3369 = vpack.c.b16 %v3337, %v3336
    %3402 = vmatprep.subr.bf16.mxu0 0
    %3403 = vmatpush1.bf16.msra.mxu0 %v3338
    %3404 = vmatprep.subr.bf16.mxu0 0
    %3405 = vmatpush1.bf16.msra.mxu0 %v3339
    %3406 = vmatprep.subr.bf16.mxu0 0
    %3407 = vmatpush1.bf16.msra.mxu0 %v3340
    %3408 = vmatprep.subr.bf16.mxu0 0
    %3409 = vmatpush1.bf16.msra.mxu0 %v3341
    %3410 = vmatprep.subr.bf16.mxu0 0
    %3411 = vmatpush1.bf16.msra.mxu0 %v3342
    %3412 = vmatprep.subr.bf16.mxu0 0
    %3413 = vmatpush1.bf16.msra.mxu0 %v3343
    %3414 = vmatprep.subr.bf16.mxu0 0
    %3415 = vmatpush1.bf16.msra.mxu0 %v3344
    %3416 = vmatprep.subr.bf16.mxu0 0
    %3417 = vmatpush1.bf16.msra.mxu0 %v3345
    %3418 = vmatprep.subr.bf16.mxu0 0
    %3419 = vmatpush1.bf16.msra.mxu0 %v3346
    %3420 = vmatprep.subr.bf16.mxu0 0
    %3421 = vmatpush1.bf16.msra.mxu0 %v3347
    %3422 = vmatprep.subr.bf16.mxu0 0
    %3423 = vmatpush1.bf16.msra.mxu0 %v3348
    %3424 = vmatprep.subr.bf16.mxu0 0
    %3425 = vmatpush1.bf16.msra.mxu0 %v3349
    %3426 = vmatprep.subr.bf16.mxu0 0
    %3427 = vmatpush1.bf16.msra.mxu0 %v3350
    %3428 = vmatprep.subr.bf16.mxu0 0
    %3429 = vmatpush1.bf16.msra.mxu0 %v3351
    %3430 = vmatprep.subr.bf16.mxu0 0
    %3431 = vmatpush1.bf16.msra.mxu0 %v3352
    %3432 = vmatprep.subr.bf16.mxu0 0
    %3433 = vmatpush1.bf16.msra.mxu0 %v3353
    %3434 = vmatprep.mubr.bf16.mxu0 %v3124
    %3435 = vmatmul.mubr.bf16.gmra.mrb[0].mxu0 %v3123
    %v3436 = vpop.f32.mrb[0].mxu0
    %v3437 = vadd.f32 %v3208, %v3436
    %v3438 = vpop.f32.mrb[0].mxu0
    %v3439 = vpop.f32.mrb[0].mxu0
    %v3440 = vadd.f32 %v3208, %v3439
    %v3441 = vpop.f32.mrb[0].mxu0
    %3442 = vmatprep.mubr.bf16.mxu0 %v3128
    %3443 = vmatmul.mubr.bf16.gmra.mrb[0].mxu0 %v3127
    %v3444 = vpop.f32.mrb[0].mxu0
    %v3445 = vadd.f32 %v3208, %v3444
    %v3446 = vpop.f32.mrb[0].mxu0
    %v3447 = vpop.f32.mrb[0].mxu0
    %v3448 = vadd.f32 %v3208, %v3447
    %v3449 = vpop.f32.mrb[0].mxu0
    %3450 = vmatprep.mubr.bf16.mxu0 %v3132
    %3451 = vmatmul.mubr.bf16.gmra.mrb[0].mxu0 %v3131
    %v3452 = vpop.f32.mrb[0].mxu0
    %v3453 = vadd.f32 %v3208, %v3452
    %v3454 = vpop.f32.mrb[0].mxu0
    %v3455 = vpop.f32.mrb[0].mxu0
    %v3456 = vadd.f32 %v3208, %v3455
    %v3457 = vpop.f32.mrb[0].mxu0
    %3458 = vmatprep.mubr.bf16.mxu0 %v3136
    %3459 = vmatmul.mubr.bf16.gmra.mrb[0].mxu0 %v3135
    %v3460 = vpop.f32.mrb[0].mxu0
    %v3461 = vadd.f32 %v3208, %v3460
    %v3462 = vpop.f32.mrb[0].mxu0
    %v3463 = vpop.f32.mrb[0].mxu0
    %v3464 = vadd.f32 %v3208, %v3463
    %v3465 = vpop.f32.mrb[0].mxu0
    %3466 = vdwg.mxu0
    %3467 = vmatprep.subr.bf16.mxu0 0
    %3468 = vmatpush1.bf16.msra.mxu0 %v3354
    %3469 = vmatprep.subr.bf16.mxu0 0
    %3470 = vmatpush1.bf16.msra.mxu0 %v3355
    %3471 = vmatprep.subr.bf16.mxu0 0
    %3472 = vmatpush1.bf16.msra.mxu0 %v3356
    %3473 = vmatprep.subr.bf16.mxu0 0
    %3474 = vmatpush1.bf16.msra.mxu0 %v3357
    %3475 = vmatprep.subr.bf16.mxu0 0
    %3476 = vmatpush1.bf16.msra.mxu0 %v3358
    %3477 = vmatprep.subr.bf16.mxu0 0
    %3478 = vmatpush1.bf16.msra.mxu0 %v3359
    %3479 = vmatprep.subr.bf16.mxu0 0
    %3480 = vmatpush1.bf16.msra.mxu0 %v3360
    %3481 = vmatprep.subr.bf16.mxu0 0
    %3482 = vmatpush1.bf16.msra.mxu0 %v3361
    %3483 = vmatprep.subr.bf16.mxu0 0
    %3484 = vmatpush1.bf16.msra.mxu0 %v3362
    %3485 = vmatprep.subr.bf16.mxu0 0
    %3486 = vmatpush1.bf16.msra.mxu0 %v3363
    %3487 = vmatprep.subr.bf16.mxu0 0
    %3488 = vmatpush1.bf16.msra.mxu0 %v3364
    %3489 = vmatprep.subr.bf16.mxu0 0
    %3490 = vmatpush1.bf16.msra.mxu0 %v3365
    %3491 = vmatprep.subr.bf16.mxu0 0
    %3492 = vmatpush1.bf16.msra.mxu0 %v3366
    %3493 = vmatprep.subr.bf16.mxu0 0
    %3494 = vmatpush1.bf16.msra.mxu0 %v3367
    %3495 = vmatprep.subr.bf16.mxu0 0
    %3496 = vmatpush1.bf16.msra.mxu0 %v3368
    %3497 = vmatprep.subr.bf16.mxu0 0
    %3498 = vmatpush1.bf16.msra.mxu0 %v3369
    %3499 = vmatprep.mubr.bf16.mxu0 %v3126
    %3500 = vmatmul.mubr.bf16.gmra.mrb[0].mxu0 %v3125
    %v3501 = vpop.f32.mrb[0].mxu0
    %v3502 = vadd.f32 %v3437, %v3501
    %v3503 = vpop.f32.mrb[0].mxu0
    %v3504 = vpop.f32.mrb[0].mxu0
    %v3505 = vadd.f32 %v3440, %v3504
    %v3506 = vpop.f32.mrb[0].mxu0
    %3507 = vmatprep.mubr.bf16.mxu0 %v3130
    %3508 = vmatmul.mubr.bf16.gmra.mrb[0].mxu0 %v3129
    %v3509 = vpop.f32.mrb[0].mxu0
    %v3510 = vadd.f32 %v3445, %v3509
    %v3511 = vpop.f32.mrb[0].mxu0
    %v3512 = vpop.f32.mrb[0].mxu0
    %v3513 = vadd.f32 %v3448, %v3512
    %v3514 = vpop.f32.mrb[0].mxu0
    %3515 = vmatprep.mubr.bf16.mxu0 %v3134
    %3516 = vmatmul.mubr.bf16.gmra.mrb[0].mxu0 %v3133
    %v3517 = vpop.f32.mrb[0].mxu0
    %v3518 = vadd.f32 %v3453, %v3517
    %v3519 = vpop.f32.mrb[0].mxu0
    %v3520 = vpop.f32.mrb[0].mxu0
    %v3521 = vadd.f32 %v3456, %v3520
    %v3522 = vpop.f32.mrb[0].mxu0
    %3523 = vmatprep.mubr.bf16.mxu0 %v3138
    %3524 = vmatmul.mubr.bf16.gmra.mrb[0].mxu0 %v3137
    %v3525 = vpop.f32.mrb[0].mxu0
    %v3526 = vadd.f32 %v3461, %v3525
    %v3527 = vpop.f32.mrb[0].mxu0
    %v3528 = vpop.f32.mrb[0].mxu0
    %v3529 = vadd.f32 %v3464, %v3528
    %v3530 = vpop.f32.mrb[0].mxu0
    %3531 = vdwg.mxu0
    %v3532 = vmax.f32 %v3502, 0.0
    %v3533 = vmax.f32 %v3505, 0.0
    %v3534 = vmax.f32 %v3510, 0.0
    %v3535 = vmax.f32 %v3513, 0.0
    %v3536 = vmax.f32 %v3518, 0.0
    %v3537 = vmax.f32 %v3521, 0.0
    %v3538 = vmax.f32 %v3526, 0.0
    %v3539 = vmax.f32 %v3529, 0.0
    %3540 = vst [vmem:[%s7] sm:$0xff] %v3532
    %3541 = vst [vmem:[%s7 + $0x8] sm:$0xff] %v3533
    %3542 = vst [vmem:[%s7 + $0x10] sm:$0xff] %v3534
    %3543 = vst [vmem:[%s7 + $0x18] sm:$0xff] %v3535
    %3544 = vst [vmem:[%s7 + $0x20] sm:$0xff] %v3536
    %3545 = vst [vmem:[%s7 + $0x28] sm:$0xff] %v3537
    %3546 = vst [vmem:[%s7 + $0x30] sm:$0xff] %v3538
    %3547 = vst [vmem:[%s7 + $0x38] sm:$0xff] %v3539
    // Predicated region
    $region46: #{bpnet_forward.1} parent=1 // pred_check
      _
    $region47: #{bpnet_forward.1} parent=1 // pred_check_branch
      %3549 = sbr.rel (0) target = $region49
    $region48: #{bpnet_forward.1} parent=1 // pred_region
      _
    $region49: #{bpnet_forward.1} parent=1 // pred_fallthru
      _
    // Predicated region
    $region50: #{bpnet_forward.1} parent=1 // pred_check
      _
    $region51: #{bpnet_forward.1} parent=1 // pred_check_branch
      %3551 = sbr.rel (0) target = $region53
    $region52: #{bpnet_forward.1} parent=1 // pred_region
      _
    $region53: #{bpnet_forward.1} parent=1 // pred_fallthru
      _
    %3552 = vsyncpa [#allocation3], 1
    %3553 = vsyncpa [#allocation5], 1
    %3554 = vsyncpa [#allocation8], 1

</llo_original>
